<compile_context>
chip_gen: v5e
topology: v5e:2x2
jax: 0.10.0
libtpu: 0.0.40
codegen_flags: <defaults>
</compile_context>

<pallas_src>
import jax
import jax.numpy as jnp
from jax.experimental import pallas as pl
from jax.experimental.pallas import tpu as pltpu

V = 512                     # synthetic vertex count (lane-dense: 4 * 128)
NJ = 22                     # SMPL-H body joints (root + 21 body joints)
JP = 32                     # padded joint count for the skinning matmul
PF = (NJ - 1) * 9           # pose-feature dim = 189
P = 192                     # padded pose-feature dim (last column = constant 1)
PARENTS = (-1, 0, 0, 0, 1, 2, 3, 4, 5, 6, 7, 8, 9, 9, 9, 12, 13, 14, 16, 17, 18, 19)


# ----------------------------- Pallas kernel -------------------------------
def lbs_kernel(pf_ref, at_ref, pd_ref, vout_ref):
    """Linear blend skinning for all batch elements in one shot.

    pf_ref:   VMEM (B, P)      bf16 flattened (R - I) pose features, zero padded,
                               last column == 1.0 (template selector)
    at_ref:   VMEM (16*B, JP)  f32 relative joint transforms, ordered (16, B, JP)
                               (row-major 4x4 entries on M-major, joints on K;
                               global translation folded into rows 3/7/11)
    pd_ref:   VMEM (P, 3*V)    bf16 pose blendshape slab [x | y | z]; the last
                               K-row holds the template vertices
    vout_ref: VMEM (3, B, V)   f32 output vertices, coordinate-major
    """
    B = vout_ref.shape[1]
    Vn = vout_ref.shape[2]

    # one MXU dot for all batches and all three coordinates: (B,P) @ (P,3V)
    # blend already contains v_posed = v_template + posedirs @ pose_feat
    blend = jnp.dot(pf_ref[...], pd_ref[...], preferred_element_type=jnp.float32)

    # one MXU dot for all batches' blended 4x4 transforms: (16B,JP) @ (JP,V)
    wt = at_ref[...]  # leave in f32; tiny operand, latency-bound matmul


def _unused():  # (guard so the doc layout above stays intact)
    pass


def lbs_kernel(pf_ref, at_ref, pd_ref, wt_ref, vout_ref):  # noqa: F811
    B = vout_ref.shape[1]
    Vn = vout_ref.shape[2]

    # (B, 3V) = (B, P) @ (P, 3V)  -- bf16 operands, f32 accumulation
    blend = jnp.dot(pf_ref[...], pd_ref[...], preferred_element_type=jnp.float32)
    # (16B, V) = (16B, JP) @ (JP, V)  -- f32 operands (tiny), f32 accumulation
    T = jnp.dot(at_ref[...], wt_ref[...], preferred_element_type=jnp.float32)

    # lane-aligned coordinate slices of v_posed, each (B, V)
    vx = blend[:, 0:Vn]
    vy = blend[:, Vn:2 * Vn]
    vz = blend[:, 2 * Vn:3 * Vn]

    # T row-slabs are contiguous (B, V) blocks thanks to the (16, B, JP) ordering
    ox = T[0 * B:1 * B] * vx + T[1 * B:2 * B] * vy + T[2 * B:3 * B] * vz + T[3 * B:4 * B]
    oy = T[4 * B:5 * B] * vx + T[5 * B:6 * B] * vy + T[6 * B:7 * B] * vz + T[7 * B:8 * B]
    oz = T[8 * B:9 * B] * vx + T[9 * B:10 * B] * vy + T[10 * B:11 * B] * vz + T[11 * B:12 * B]

    # three unmasked lane-dense (B, V) stores
    vout_ref[0, :, :] = ox
    vout_ref[1, :, :] = oy
    vout_ref[2, :, :] = oz


def lbs_pallas(pose_feat, at_flat, pd_slab, w_t):
    """Single-invocation pallas_call (no grid): all operands fit VMEM easily."""
    B = pose_feat.shape[0]
    Vn = w_t.shape[1]
    vmem = pl.BlockSpec(memory_space=pltpu.MemorySpace.VMEM)
    return pl.pallas_call(
        lbs_kernel,
        out_shape=jax.ShapeDtypeStruct((3, B, Vn), jnp.float32),
        in_specs=[vmem, vmem, vmem, vmem],
        out_specs=vmem,
    )(pose_feat, at_flat, pd_slab, w_t)


# ------------------------------ JAX glue -----------------------------------
def rodrigues(aa):
    """Axis-angle (..., 3) -> rotation matrices (..., 3, 3)."""
    angle = jnp.sqrt(jnp.sum(aa * aa, axis=-1, keepdims=True) + 1e-12)
    axis = aa / angle
    c = jnp.cos(angle)[..., None]
    s = jnp.sin(angle)[..., None]
    rx, ry, rz = axis[..., 0], axis[..., 1], axis[..., 2]
    z = jnp.zeros_like(rx)
    K = jnp.stack([z, -rz, ry, rz, z, -rx, -ry, rx, z], axis=-1)
    K = K.reshape(aa.shape[:-1] + (3, 3))
    eye = jnp.eye(3, dtype=aa.dtype)
    outer = axis[..., :, None] * axis[..., None, :]
    return c * eye + s * K + (1.0 - c) * outer


def rigid_chain(R, joints):
    """Forward kinematics along the SMPL kinematic tree.

    R: (B, NJ, 3, 3) joint rotations; joints: (NJ, 3) rest-pose joints.
    Returns posed joints (B, NJ, 3) and relative transforms A (B, NJ, 4, 4)."""
    B = R.shape[0]
    parent_idx = jnp.array(PARENTS[1:], dtype=jnp.int32)
    rel = joints - jnp.concatenate(
        [jnp.zeros((1, 3), joints.dtype), joints[parent_idx]], axis=0)
    T = jnp.concatenate(
        [R, jnp.broadcast_to(rel[None, :, :, None], (B, NJ, 3, 1))], axis=-1)
    bottom = jnp.broadcast_to(
        jnp.array([0.0, 0.0, 0.0, 1.0], R.dtype)[None, None, None, :],
        (B, NJ, 1, 4))
    T = jnp.concatenate([T, bottom], axis=-2)                 # (B, NJ, 4, 4)

    Gs = [T[:, 0]]
    for i in range(1, NJ):                                    # tiny sequential chain
        Gs.append(jnp.matmul(Gs[PARENTS[i]], T[:, i]))
    G = jnp.stack(Gs, axis=1)                                 # (B, NJ, 4, 4)

    posed_joints = G[:, :, :3, 3]
    corr = jnp.einsum('bjrc,jc->bjr', G[:, :, :3, :3], joints)
    A = G.at[:, :, :3, 3].add(-corr)
    return posed_joints, A


def prepare_lbs_inputs(params, body_params):
    """Build the kernel operands from the torch-module call signature."""
    kept = {k: v for k, v in body_params.items()
            if k in ['pose_body', 'trans', 'root_orient', 'joints']}
    pose_body = kept['pose_body']        # (B, 63)
    root_orient = kept['root_orient']    # (B, 3)
    trans = kept['trans']                # (B, 3)
    B = pose_body.shape[0]

    full_pose = jnp.concatenate([root_orient, pose_body], axis=-1).reshape(B, NJ, 3)
    R = rodrigues(full_pose)                                  # (B, NJ, 3, 3)

    # pose feature = flattened (R_joint - I) for the 21 non-root joints,
    # zero padded to P with the LAST column set to exactly 1.0 so the matching
    # posedirs K-row (the template vertices) is selected by the matmul.
    pose_feat = (R[:, 1:] - jnp.eye(3, dtype=R.dtype)).reshape(B, PF)
    pose_feat = jnp.pad(pose_feat, ((0, 0), (0, P - PF)))
    pose_feat = pose_feat.at[:, P - 1].set(1.0).astype(jnp.bfloat16)  # 1.0 exact in bf16

    # betas / dmpls are zeros in this call path -> v_shaped == v_template
    vtemp3 = params['v_template3']                            # (3, V)
    joints = params['J_regressor'] @ vtemp3.T                 # (NJ, 3)

    posed_joints, A = rigid_chain(R, joints)
    # fold the global translation into the joint transforms: the f32 skinning
    # weights sum to 1 per vertex, so sum_j w_j * (A_j_trans + t) = T_trans + t.
    A = A.at[:, :, :3, 3].add(trans[:, None, :])
    # reorder as (16, B, NJ) so every T row-slab in the kernel is a contiguous
    # (B, V) slice; pad joints to JP; keep f32 (only a few KB of DMA).
    AT = jnp.transpose(A.reshape(B, NJ, 16), (2, 0, 1))       # (16, B, NJ)
    AT = jnp.pad(AT, ((0, 0), (0, 0), (0, JP - NJ)))          # (16, B, JP)
    at_flat = AT.reshape(16 * B, JP).astype(jnp.float32)

    return pose_feat, at_flat, posed_joints, trans, full_pose


def body_model_forward(params, body_params):
    """Mirrors BodyModel.forward: keeps only pose_body/trans/root_orient(/joints)."""
    pose_feat, at_flat, posed_joints, trans, full_pose = prepare_lbs_inputs(
        params, body_params)
    B = pose_feat.shape[0]

    verts3 = lbs_pallas(pose_feat, at_flat, params['posedirs_slab'],
                        params['lbs_weights_T'])              # (3, B, V)
    verts = jnp.transpose(verts3, (1, 2, 0))                  # (B, V, 3)
    Jtr = posed_joints + trans[:, None, :]
    return {'v': verts, 'Jtr': Jtr, 'full_pose': full_pose.reshape(B, NJ * 3)}


def reference_verts(pose_feat, at_flat, pd_slab, w_t):
    """Pure-JAX reference for the in-kernel LBS (same operands, f32 acc)."""
    B = pose_feat.shape[0]
    Vn = w_t.shape[1]
    pf = pose_feat.astype(jnp.float32)
    pd = pd_slab.astype(jnp.float32)
    blend = jnp.dot(pf, pd, precision=jax.lax.Precision.HIGHEST)      # (B, 3V)
    vx, vy, vz = blend[:, :Vn], blend[:, Vn:2 * Vn], blend[:, 2 * Vn:]
    T = jnp.dot(at_flat, w_t,
                precision=jax.lax.Precision.HIGHEST).reshape(16, B, Vn)
    ox = T[0] * vx + T[1] * vy + T[2] * vz + T[3]
    oy = T[4] * vx + T[5] * vy + T[6] * vz + T[7]
    oz = T[8] * vx + T[9] * vy + T[10] * vz + T[11]
    return jnp.stack([ox, oy, oz], axis=0)                    # (3, B, V)


if __name__ == "__main__":
    key = jax.random.PRNGKey(0)
    k1, k2, k3, k4, k5, k6, k7 = jax.random.split(key, 7)

    # Deterministic synthetic SMPL-H-style parameters (no .npz loading).
    v_template3 = jax.random.normal(k1, (3, V), jnp.float32) * 0.3

    # posedirs slab: (P, 3*V) with columns [x | y | z]; rows PF..P-2 zero pad,
    # row P-1 holds the template vertices (selected by pose_feat's 1.0 column).
    posedirs = jax.random.normal(k2, (PF, 3, V), jnp.float32) * 0.01
    pd_slab = jnp.zeros((P, 3 * V), jnp.float32)
    pd_slab = pd_slab.at[:PF].set(posedirs.reshape(PF, 3 * V))
    pd_slab = pd_slab.at[P - 1].set(v_template3.reshape(3 * V))
    pd_slab = pd_slab.astype(jnp.bfloat16)

    jreg = jnp.abs(jax.random.normal(k3, (NJ, V), jnp.float32))
    jreg = jreg / jnp.sum(jreg, axis=-1, keepdims=True)

    # skinning weights kept in f32 (64 KB) so columns sum to 1 exactly and the
    # translation fold into A is exact.
    lbs_w = jax.nn.softmax(jax.random.normal(k4, (V, NJ), jnp.float32) * 2.0, axis=-1)
    lbs_w_t = jnp.zeros((JP, V), jnp.float32).at[:NJ].set(lbs_w.T)

    # TODO(synk): shapedirs/dmpldirs omitted — betas and dmpls are zeros in this
    # call path (the torch module never passes them), so they contribute nothing.

    params = {
        'v_template3': v_template3,
        'posedirs_slab': pd_slab,
        'J_regressor': jreg,
        'lbs_weights_T': lbs_w_t,
    }

    # small demo batch (multiple of 8 sublanes); raise to 64-256 to amortize the
    # posedirs DMA — the kernel is batch-agnostic.
    B = 8
    body_params = {
        'pose_body': jax.random.normal(k5, (B, 63), jnp.float32) * 0.3,
        'root_orient': jax.random.normal(k6, (B, 3), jnp.float32) * 0.3,
        'trans': jax.random.normal(k7, (B, 3), jnp.float32),
        'betas': jnp.zeros((B, 16), jnp.float32),   # filtered out, like the torch code
    }

    out = jax.block_until_ready(body_model_forward(params, body_params))

    # Verify the Pallas LBS kernel against a pure-JAX reference (same operands).
    pose_feat, at_flat, posed_joints, trans, _ = prepare_lbs_inputs(params, body_params)
    ref = reference_verts(pose_feat, at_flat, params['posedirs_slab'],
                          params['lbs_weights_T'])
    got = jnp.transpose(out['v'], (2, 0, 1))                  # back to (3, B, V)
    assert jnp.allclose(got, ref, atol=1e-3, rtol=1e-3), "kernel mismatch vs reference"
    assert out['v'].shape == (B, V, 3) and out['Jtr'].shape == (B, NJ, 3)

    print("KERNEL_OK")
</pallas_src>

<mosaic_0001>
module attributes {stable_mosaic.version = 11 : i64} {
  func.func @lbs_kernel(%arg0: memref<8x192xbf16, #tpu.memory_space<vmem>>, %arg1: memref<128x32xf32, #tpu.memory_space<vmem>>, %arg2: memref<192x1536xbf16, #tpu.memory_space<vmem>>, %arg3: memref<32x512xf32, #tpu.memory_space<vmem>>, %arg4: memref<3x8x512xf32, #tpu.memory_space<vmem>>) attributes {dimension_semantics = [], scalar_prefetch = 0 : i64, scratch_operands = 0 : i64, tpu.core_type = #tpu.core_type<tc>} {
    %c0 = arith.constant 0 : index
    %c0_0 = arith.constant 0 : index
    %0 = vector.load %arg0[%c0, %c0_0] : memref<8x192xbf16, #tpu.memory_space<vmem>>, vector<8x192xbf16>
    %c0_1 = arith.constant 0 : index
    %c0_2 = arith.constant 0 : index
    %1 = vector.load %arg2[%c0_1, %c0_2] : memref<192x1536xbf16, #tpu.memory_space<vmem>>, vector<192x1536xbf16>
    %cst = arith.constant dense<0.000000e+00> : vector<8x1536xf32>
    %2 = tpu.matmul %0, %1, %cst {dimension_numbers = #tpu.dot_dimension_numbers<[1], [0], [0], [1], [0, 0, 1, 1], [], []>} : vector<8x192xbf16>, vector<192x1536xbf16>, vector<8x1536xf32> -> vector<8x1536xf32>
    %c0_3 = arith.constant 0 : index
    %c0_4 = arith.constant 0 : index
    %3 = vector.load %arg1[%c0_3, %c0_4] : memref<128x32xf32, #tpu.memory_space<vmem>>, vector<128x32xf32>
    %c0_5 = arith.constant 0 : index
    %c0_6 = arith.constant 0 : index
    %4 = vector.load %arg3[%c0_5, %c0_6] : memref<32x512xf32, #tpu.memory_space<vmem>>, vector<32x512xf32>
    %cst_7 = arith.constant dense<0.000000e+00> : vector<128x512xf32>
    %5 = tpu.matmul %3, %4, %cst_7 {dimension_numbers = #tpu.dot_dimension_numbers<[1], [0], [0], [1], [0, 0, 1, 1], [], []>} : vector<128x32xf32>, vector<32x512xf32>, vector<128x512xf32> -> vector<128x512xf32>
    %6 = vector.extract_strided_slice %2 {offsets = [0, 0], sizes = [8, 512], strides = [1, 1]} : vector<8x1536xf32> to vector<8x512xf32>
    %7 = vector.extract_strided_slice %2 {offsets = [0, 512], sizes = [8, 512], strides = [1, 1]} : vector<8x1536xf32> to vector<8x512xf32>
    %8 = vector.extract_strided_slice %2 {offsets = [0, 1024], sizes = [8, 512], strides = [1, 1]} : vector<8x1536xf32> to vector<8x512xf32>
    %9 = vector.extract_strided_slice %5 {offsets = [0, 0], sizes = [8, 512], strides = [1, 1]} : vector<128x512xf32> to vector<8x512xf32>
    %10 = arith.mulf %9, %6 : vector<8x512xf32>
    %11 = vector.extract_strided_slice %5 {offsets = [8, 0], sizes = [8, 512], strides = [1, 1]} : vector<128x512xf32> to vector<8x512xf32>
    %12 = arith.mulf %11, %7 : vector<8x512xf32>
    %13 = arith.addf %10, %12 : vector<8x512xf32>
    %14 = vector.extract_strided_slice %5 {offsets = [16, 0], sizes = [8, 512], strides = [1, 1]} : vector<128x512xf32> to vector<8x512xf32>
    %15 = arith.mulf %14, %8 : vector<8x512xf32>
    %16 = arith.addf %13, %15 : vector<8x512xf32>
    %17 = vector.extract_strided_slice %5 {offsets = [24, 0], sizes = [8, 512], strides = [1, 1]} : vector<128x512xf32> to vector<8x512xf32>
    %18 = arith.addf %16, %17 : vector<8x512xf32>
    %19 = vector.extract_strided_slice %5 {offsets = [32, 0], sizes = [8, 512], strides = [1, 1]} : vector<128x512xf32> to vector<8x512xf32>
    %20 = arith.mulf %19, %6 : vector<8x512xf32>
    %21 = vector.extract_strided_slice %5 {offsets = [40, 0], sizes = [8, 512], strides = [1, 1]} : vector<128x512xf32> to vector<8x512xf32>
    %22 = arith.mulf %21, %7 : vector<8x512xf32>
    %23 = arith.addf %20, %22 : vector<8x512xf32>
    %24 = vector.extract_strided_slice %5 {offsets = [48, 0], sizes = [8, 512], strides = [1, 1]} : vector<128x512xf32> to vector<8x512xf32>
    %25 = arith.mulf %24, %8 : vector<8x512xf32>
    %26 = arith.addf %23, %25 : vector<8x512xf32>
    %27 = vector.extract_strided_slice %5 {offsets = [56, 0], sizes = [8, 512], strides = [1, 1]} : vector<128x512xf32> to vector<8x512xf32>
    %28 = arith.addf %26, %27 : vector<8x512xf32>
    %29 = vector.extract_strided_slice %5 {offsets = [64, 0], sizes = [8, 512], strides = [1, 1]} : vector<128x512xf32> to vector<8x512xf32>
    %30 = arith.mulf %29, %6 : vector<8x512xf32>
    %31 = vector.extract_strided_slice %5 {offsets = [72, 0], sizes = [8, 512], strides = [1, 1]} : vector<128x512xf32> to vector<8x512xf32>
    %32 = arith.mulf %31, %7 : vector<8x512xf32>
    %33 = arith.addf %30, %32 : vector<8x512xf32>
    %34 = vector.extract_strided_slice %5 {offsets = [80, 0], sizes = [8, 512], strides = [1, 1]} : vector<128x512xf32> to vector<8x512xf32>
    %35 = arith.mulf %34, %8 : vector<8x512xf32>
    %36 = arith.addf %33, %35 : vector<8x512xf32>
    %37 = vector.extract_strided_slice %5 {offsets = [88, 0], sizes = [8, 512], strides = [1, 1]} : vector<128x512xf32> to vector<8x512xf32>
    %38 = arith.addf %36, %37 : vector<8x512xf32>
    %c0_8 = arith.constant 0 : index
    %c0_9 = arith.constant 0 : index
    %c0_10 = arith.constant 0 : index
    %39 = vector.load %arg4[%c0_8, %c0_9, %c0_10] : memref<3x8x512xf32, #tpu.memory_space<vmem>>, vector<1x8x512xf32>
    %40 = vector.shape_cast %39 : vector<1x8x512xf32> to vector<8x512xf32>
    %41 = vector.shape_cast %18 : vector<8x512xf32> to vector<1x8x512xf32>
    tpu.vector_store %arg4[%c0_8, %c0_9, %c0_10], %41 {strides = array<i32>} : memref<3x8x512xf32, #tpu.memory_space<vmem>>, vector<1x8x512xf32>,
    %c1 = arith.constant 1 : index
    %c0_11 = arith.constant 0 : index
    %c0_12 = arith.constant 0 : index
    %42 = vector.load %arg4[%c1, %c0_11, %c0_12] : memref<3x8x512xf32, #tpu.memory_space<vmem>>, vector<1x8x512xf32>
    %43 = vector.shape_cast %42 : vector<1x8x512xf32> to vector<8x512xf32>
    %44 = vector.shape_cast %28 : vector<8x512xf32> to vector<1x8x512xf32>
    tpu.vector_store %arg4[%c1, %c0_11, %c0_12], %44 {strides = array<i32>} : memref<3x8x512xf32, #tpu.memory_space<vmem>>, vector<1x8x512xf32>,
    %c2 = arith.constant 2 : index
    %c0_13 = arith.constant 0 : index
    %c0_14 = arith.constant 0 : index
    %45 = vector.load %arg4[%c2, %c0_13, %c0_14] : memref<3x8x512xf32, #tpu.memory_space<vmem>>, vector<1x8x512xf32>
    %46 = vector.shape_cast %45 : vector<1x8x512xf32> to vector<8x512xf32>
    %47 = vector.shape_cast %38 : vector<8x512xf32> to vector<1x8x512xf32>
    tpu.vector_store %arg4[%c2, %c0_13, %c0_14], %47 {strides = array<i32>} : memref<3x8x512xf32, #tpu.memory_space<vmem>>, vector<1x8x512xf32>,
    return
  }
}

</mosaic_0001>

<llo_original>
// kernel: tpu_custom_call.1
$region0: #{tpu_custom_call.1}
  #allocation0 [shape = 'u32[]', space=smem, size = 0x4, offset = 0x4, fixed_abs, tag = 'smem constant byte address 0x4 - core index']
  #allocation1 [shape = 'u32[72,128]{1,0:T(1,128)}', space=vmem, size = 0x9000, scoped, tag = 'internal scratch']
  %s0 = inlined_call_operand.vmem [shape: bf16[8,192], index: 0, kind: input, shape index: {}]
  %s1 = inlined_call_operand.vmem [shape: f32[128,32], index: 1, kind: input, shape index: {}]
  %s2 = inlined_call_operand.hbm [shape: bf16[192,1536], index: 2, kind: input, shape index: {}]
  %s3 = inlined_call_operand.vmem [shape: f32[32,512], index: 3, kind: input, shape index: {}]
  %s4 = inlined_call_operand.hbm [shape: f32[3,8,512], index: 4, kind: output, shape index: {}]
  %s5 = sld [smem:[#allocation0]]
  $region30: #{tpu_custom_call.1} parent=0
    _
  %s7 = ssub.s32 1, %s5
  %s8 = scalar_select 0, %s7, %s5
  $region1: #{tpu_custom_call.1} parent=0
    #allocation2 [shape = 'u8[589824]{0}', space=vmem, size = 0x90000, scoped, tag = 'input window, operand 2, single buffered']
    #allocation3 [shape = 's32[1]{0}', space=sflag, size = 0x4, scoped, tag = 'scoped memory for tpu_custom_call.1']
    #allocation4 [shape = 's32[1]{0}', space=sflag, size = 0x4, scoped, tag = 'scoped memory for tpu_custom_call.1']
    #allocation5 [shape = 'u8[49152]{0}', space=vmem, size = 0xc000, scoped, tag = 'output window, operand 0, single buffered']
    %9 = vsyncpa [#allocation3], 0
    %10 = vsyncpa [#allocation4], 0
    // Predicated region
    $region2: #{tpu_custom_call.1} parent=1 // pred_check
      _
    $region3: #{tpu_custom_call.1} parent=1 // pred_check_branch
      %12 = sbr.rel (0) target = $region5
    $region4: #{tpu_custom_call.1} parent=1 // pred_region
      _
    $region5: #{tpu_custom_call.1} parent=1 // pred_fallthru
      _
    // Predicated region
    $region6: #{tpu_custom_call.1} parent=1 // pred_check
      _
    $region7: #{tpu_custom_call.1} parent=1 // pred_check_branch
      %14 = sbr.rel (0) target = $region9
    $region8: #{tpu_custom_call.1} parent=1 // pred_region
      _
    $region9: #{tpu_custom_call.1} parent=1 // pred_fallthru
      _
    // Predicated region
    $region10: #{tpu_custom_call.1} parent=1 // pred_check
      _
    $region11: #{tpu_custom_call.1} parent=1 // pred_check_branch
      %16 = sbr.rel (0) target = $region13
    $region12: #{tpu_custom_call.1} parent=1 // pred_region
      %18 = vsyncadd [#allocation3], 0
      %s19 = sshll.u32 %s2, 4
      %s20 = int_to_ptr.hbm [resolvable:$true] %s19
      %s21 = sshll.u32 [#allocation2], 4
      %s22 = int_to_ptr.vmem [resolvable:$true] %s21
      %27 = dma.hbm_to_vmem [thread:$0]  %s20, 18432, %s22, [#allocation3], 768, 768, 48
    $region13: #{tpu_custom_call.1} parent=1 // pred_fallthru
      _
    // Predicated region
    $region14: #{tpu_custom_call.1} parent=1 // pred_check
      _
    $region15: #{tpu_custom_call.1} parent=1 // pred_check_branch
      %29 = sbr.rel (0) target = $region17
    $region16: #{tpu_custom_call.1} parent=1 // pred_region
      _
    $region17: #{tpu_custom_call.1} parent=1 // pred_fallthru
      _
    // Predicated region
    $region18: #{tpu_custom_call.1} parent=1 // pred_check
      _
    $region19: #{tpu_custom_call.1} parent=1 // pred_check_branch
      %31 = sbr.rel (0) target = $region21
    $region20: #{tpu_custom_call.1} parent=1 // pred_region
      %33 = dma.done [#allocation3], 18432
    $region21: #{tpu_custom_call.1} parent=1 // pred_fallthru
      _
    %v35 = vld [vmem:[%s0] sm:$0xff]
    %v36 = vld [vmem:[#allocation2] sm:$0xff]
    %v37 = vld [vmem:[#allocation2 + $0x8] sm:$0xff]
    %v38 = vld [vmem:[#allocation2 + $0x10] sm:$0xff]
    %v39 = vld [vmem:[#allocation2 + $0x18] sm:$0xff]
    %v40 = vld [vmem:[#allocation2 + $0x20] sm:$0xff]
    %v41 = vld [vmem:[#allocation2 + $0x28] sm:$0xff]
    %v42 = vld [vmem:[#allocation2 + $0x30] sm:$0xff]
    %v43 = vld [vmem:[#allocation2 + $0x38] sm:$0xff]
    %v44 = vld [vmem:[#allocation2 + $0x40] sm:$0xff]
    %v45 = vld [vmem:[#allocation2 + $0x48] sm:$0xff]
    %v46 = vld [vmem:[#allocation2 + $0x50] sm:$0xff]
    %v47 = vld [vmem:[#allocation2 + $0x58] sm:$0xff]
    %v48 = vld [vmem:[#allocation2 + $0x60] sm:$0xff]
    %v49 = vld [vmem:[#allocation2 + $0x68] sm:$0xff]
    %v50 = vld [vmem:[#allocation2 + $0x70] sm:$0xff]
    %v51 = vld [vmem:[#allocation2 + $0x78] sm:$0xff]
    %v52 = vld [vmem:[#allocation2 + $0x80] sm:$0xff]
    %v53 = vld [vmem:[#allocation2 + $0x88] sm:$0xff]
    %v54 = vld [vmem:[#allocation2 + $0x90] sm:$0xff]
    %v55 = vld [vmem:[#allocation2 + $0x98] sm:$0xff]
    %v56 = vld [vmem:[#allocation2 + $0xa0] sm:$0xff]
    %v57 = vld [vmem:[#allocation2 + $0xa8] sm:$0xff]
    %v58 = vld [vmem:[#allocation2 + $0xb0] sm:$0xff]
    %v59 = vld [vmem:[#allocation2 + $0xb8] sm:$0xff]
    %v60 = vld [vmem:[#allocation2 + $0xc0] sm:$0xff]
    %v61 = vld [vmem:[#allocation2 + $0xc8] sm:$0xff]
    %v62 = vld [vmem:[#allocation2 + $0xd0] sm:$0xff]
    %v63 = vld [vmem:[#allocation2 + $0xd8] sm:$0xff]
    %v64 = vld [vmem:[#allocation2 + $0xe0] sm:$0xff]
    %v65 = vld [vmem:[#allocation2 + $0xe8] sm:$0xff]
    %v66 = vld [vmem:[#allocation2 + $0xf0] sm:$0xff]
    %v67 = vld [vmem:[#allocation2 + $0xf8] sm:$0xff]
    %v68 = vld [vmem:[#allocation2 + $0x100] sm:$0xff]
    %v69 = vld [vmem:[#allocation2 + $0x108] sm:$0xff]
    %v70 = vld [vmem:[#allocation2 + $0x110] sm:$0xff]
    %v71 = vld [vmem:[#allocation2 + $0x118] sm:$0xff]
    %v72 = vld [vmem:[#allocation2 + $0x120] sm:$0xff]
    %v73 = vld [vmem:[#allocation2 + $0x128] sm:$0xff]
    %v74 = vld [vmem:[#allocation2 + $0x130] sm:$0xff]
    %v75 = vld [vmem:[#allocation2 + $0x138] sm:$0xff]
    %v76 = vld [vmem:[#allocation2 + $0x140] sm:$0xff]
    %v77 = vld [vmem:[#allocation2 + $0x148] sm:$0xff]
    %v78 = vld [vmem:[#allocation2 + $0x150] sm:$0xff]
    %v79 = vld [vmem:[#allocation2 + $0x158] sm:$0xff]
    %v80 = vld [vmem:[#allocation2 + $0x160] sm:$0xff]
    %v81 = vld [vmem:[#allocation2 + $0x168] sm:$0xff]
    %v82 = vld [vmem:[#allocation2 + $0x170] sm:$0xff]
    %v83 = vld [vmem:[#allocation2 + $0x178] sm:$0xff]
    %v84 = vld [vmem:[#allocation2 + $0x180] sm:$0xff]
    %v85 = vld [vmem:[#allocation2 + $0x188] sm:$0xff]
    %v86 = vld [vmem:[#allocation2 + $0x190] sm:$0xff]
    %v87 = vld [vmem:[#allocation2 + $0x198] sm:$0xff]
    %v88 = vld [vmem:[#allocation2 + $0x1a0] sm:$0xff]
    %v89 = vld [vmem:[#allocation2 + $0x1a8] sm:$0xff]
    %v90 = vld [vmem:[#allocation2 + $0x1b0] sm:$0xff]
    %v91 = vld [vmem:[#allocation2 + $0x1b8] sm:$0xff]
    %v92 = vld [vmem:[#allocation2 + $0x1c0] sm:$0xff]
    %v93 = vld [vmem:[#allocation2 + $0x1c8] sm:$0xff]
    %v94 = vld [vmem:[#allocation2 + $0x1d0] sm:$0xff]
    %v95 = vld [vmem:[#allocation2 + $0x1d8] sm:$0xff]
    %v96 = vld [vmem:[#allocation2 + $0x1e0] sm:$0xff]
    %v97 = vld [vmem:[#allocation2 + $0x1e8] sm:$0xff]
    %v98 = vld [vmem:[#allocation2 + $0x1f0] sm:$0xff]
    %v99 = vld [vmem:[#allocation2 + $0x1f8] sm:$0xff]
    %v100 = vld [vmem:[#allocation2 + $0x200] sm:$0xff]
    %v101 = vld [vmem:[#allocation2 + $0x208] sm:$0xff]
    %v102 = vld [vmem:[#allocation2 + $0x210] sm:$0xff]
    %v103 = vld [vmem:[#allocation2 + $0x218] sm:$0xff]
    %v104 = vld [vmem:[#allocation2 + $0x220] sm:$0xff]
    %v105 = vld [vmem:[#allocation2 + $0x228] sm:$0xff]
    %v106 = vld [vmem:[#allocation2 + $0x230] sm:$0xff]
    %v107 = vld [vmem:[#allocation2 + $0x238] sm:$0xff]
    %v108 = vld [vmem:[#allocation2 + $0x240] sm:$0xff]
    %v109 = vld [vmem:[#allocation2 + $0x248] sm:$0xff]
    %v110 = vld [vmem:[#allocation2 + $0x250] sm:$0xff]
    %v111 = vld [vmem:[#allocation2 + $0x258] sm:$0xff]
    %v112 = vld [vmem:[#allocation2 + $0x260] sm:$0xff]
    %v113 = vld [vmem:[#allocation2 + $0x268] sm:$0xff]
    %v114 = vld [vmem:[#allocation2 + $0x270] sm:$0xff]
    %v115 = vld [vmem:[#allocation2 + $0x278] sm:$0xff]
    %v116 = vld [vmem:[#allocation2 + $0x280] sm:$0xff]
    %v117 = vld [vmem:[#allocation2 + $0x288] sm:$0xff]
    %v118 = vld [vmem:[#allocation2 + $0x290] sm:$0xff]
    %v119 = vld [vmem:[#allocation2 + $0x298] sm:$0xff]
    %v120 = vld [vmem:[#allocation2 + $0x2a0] sm:$0xff]
    %v121 = vld [vmem:[#allocation2 + $0x2a8] sm:$0xff]
    %v122 = vld [vmem:[#allocation2 + $0x2b0] sm:$0xff]
    %v123 = vld [vmem:[#allocation2 + $0x2b8] sm:$0xff]
    %v124 = vld [vmem:[#allocation2 + $0x2c0] sm:$0xff]
    %v125 = vld [vmem:[#allocation2 + $0x2c8] sm:$0xff]
    %v126 = vld [vmem:[#allocation2 + $0x2d0] sm:$0xff]
    %v127 = vld [vmem:[#allocation2 + $0x2d8] sm:$0xff]
    %v128 = vld [vmem:[#allocation2 + $0x2e0] sm:$0xff]
    %v129 = vld [vmem:[#allocation2 + $0x2e8] sm:$0xff]
    %v130 = vld [vmem:[#allocation2 + $0x2f0] sm:$0xff]
    %v131 = vld [vmem:[#allocation2 + $0x2f8] sm:$0xff]
    %v132 = vld [vmem:[#allocation2 + $0x300] sm:$0xff]
    %v133 = vld [vmem:[#allocation2 + $0x308] sm:$0xff]
    %v134 = vld [vmem:[#allocation2 + $0x310] sm:$0xff]
    %v135 = vld [vmem:[#allocation2 + $0x318] sm:$0xff]
    %v136 = vld [vmem:[#allocation2 + $0x320] sm:$0xff]
    %v137 = vld [vmem:[#allocation2 + $0x328] sm:$0xff]
    %v138 = vld [vmem:[#allocation2 + $0x330] sm:$0xff]
    %v139 = vld [vmem:[#allocation2 + $0x338] sm:$0xff]
    %v140 = vld [vmem:[#allocation2 + $0x340] sm:$0xff]
    %v141 = vld [vmem:[#allocation2 + $0x348] sm:$0xff]
    %v142 = vld [vmem:[#allocation2 + $0x350] sm:$0xff]
    %v143 = vld [vmem:[#allocation2 + $0x358] sm:$0xff]
    %v144 = vld [vmem:[#allocation2 + $0x360] sm:$0xff]
    %v145 = vld [vmem:[#allocation2 + $0x368] sm:$0xff]
    %v146 = vld [vmem:[#allocation2 + $0x370] sm:$0xff]
    %v147 = vld [vmem:[#allocation2 + $0x378] sm:$0xff]
    %v148 = vld [vmem:[#allocation2 + $0x380] sm:$0xff]
    %v149 = vld [vmem:[#allocation2 + $0x388] sm:$0xff]
    %v150 = vld [vmem:[#allocation2 + $0x390] sm:$0xff]
    %v151 = vld [vmem:[#allocation2 + $0x398] sm:$0xff]
    %v152 = vld [vmem:[#allocation2 + $0x3a0] sm:$0xff]
    %v153 = vld [vmem:[#allocation2 + $0x3a8] sm:$0xff]
    %v154 = vld [vmem:[#allocation2 + $0x3b0] sm:$0xff]
    %v155 = vld [vmem:[#allocation2 + $0x3b8] sm:$0xff]
    %v156 = vld [vmem:[#allocation2 + $0x3c0] sm:$0xff]
    %v157 = vld [vmem:[#allocation2 + $0x3c8] sm:$0xff]
    %v158 = vld [vmem:[#allocation2 + $0x3d0] sm:$0xff]
    %v159 = vld [vmem:[#allocation2 + $0x3d8] sm:$0xff]
    %v160 = vld [vmem:[#allocation2 + $0x3e0] sm:$0xff]
    %v161 = vld [vmem:[#allocation2 + $0x3e8] sm:$0xff]
    %v162 = vld [vmem:[#allocation2 + $0x3f0] sm:$0xff]
    %v163 = vld [vmem:[#allocation2 + $0x3f8] sm:$0xff]
    %v164 = vld [vmem:[#allocation2 + $0x400] sm:$0xff]
    %v165 = vld [vmem:[#allocation2 + $0x408] sm:$0xff]
    %v166 = vld [vmem:[#allocation2 + $0x410] sm:$0xff]
    %v167 = vld [vmem:[#allocation2 + $0x418] sm:$0xff]
    %v168 = vld [vmem:[#allocation2 + $0x420] sm:$0xff]
    %v169 = vld [vmem:[#allocation2 + $0x428] sm:$0xff]
    %v170 = vld [vmem:[#allocation2 + $0x430] sm:$0xff]
    %v171 = vld [vmem:[#allocation2 + $0x438] sm:$0xff]
    %v172 = vld [vmem:[#allocation2 + $0x440] sm:$0xff]
    %v173 = vld [vmem:[#allocation2 + $0x448] sm:$0xff]
    %v174 = vld [vmem:[#allocation2 + $0x450] sm:$0xff]
    %v175 = vld [vmem:[#allocation2 + $0x458] sm:$0xff]
    %v176 = vld [vmem:[#allocation2 + $0x460] sm:$0xff]
    %v177 = vld [vmem:[#allocation2 + $0x468] sm:$0xff]
    %v178 = vld [vmem:[#allocation2 + $0x470] sm:$0xff]
    %v179 = vld [vmem:[#allocation2 + $0x478] sm:$0xff]
    %v181 = vunpack.c.l.b16 %v35
    %v182 = vunpack.c.h.b16 %v35
    %v183 = vpack.c.b16 %v181, %v181
    %v184 = vpack.c.b16 %v182, %v182
    %v330 = vunpack.c.l.b16 %v36
    %v331 = vunpack.c.h.b16 %v36
    %v332 = vunpack.c.l.b16 %v37
    %v333 = vunpack.c.h.b16 %v37
    %v334 = vunpack.c.l.b16 %v38
    %v335 = vunpack.c.h.b16 %v38
    %v336 = vunpack.c.l.b16 %v39
    %v337 = vunpack.c.h.b16 %v39
    %v338 = vunpack.c.l.b16 %v40
    %v339 = vunpack.c.h.b16 %v40
    %v340 = vunpack.c.l.b16 %v41
    %v341 = vunpack.c.h.b16 %v41
    %v342 = vunpack.c.l.b16 %v42
    %v343 = vunpack.c.h.b16 %v42
    %v344 = vunpack.c.l.b16 %v43
    %v345 = vunpack.c.h.b16 %v43
    %v346 = vunpack.c.l.b16 %v44
    %v347 = vunpack.c.h.b16 %v44
    %v348 = vunpack.c.l.b16 %v45
    %v349 = vunpack.c.h.b16 %v45
    %v350 = vunpack.c.l.b16 %v46
    %v351 = vunpack.c.h.b16 %v46
    %v352 = vunpack.c.l.b16 %v47
    %v353 = vunpack.c.h.b16 %v47
    %v354 = vunpack.c.l.b16 %v48
    %v355 = vunpack.c.h.b16 %v48
    %v356 = vunpack.c.l.b16 %v49
    %v357 = vunpack.c.h.b16 %v49
    %v358 = vunpack.c.l.b16 %v50
    %v359 = vunpack.c.h.b16 %v50
    %v360 = vunpack.c.l.b16 %v51
    %v361 = vunpack.c.h.b16 %v51
    %v362 = vunpack.c.l.b16 %v52
    %v363 = vunpack.c.h.b16 %v52
    %v364 = vunpack.c.l.b16 %v53
    %v365 = vunpack.c.h.b16 %v53
    %v366 = vunpack.c.l.b16 %v54
    %v367 = vunpack.c.h.b16 %v54
    %v368 = vunpack.c.l.b16 %v55
    %v369 = vunpack.c.h.b16 %v55
    %v370 = vunpack.c.l.b16 %v56
    %v371 = vunpack.c.h.b16 %v56
    %v372 = vunpack.c.l.b16 %v57
    %v373 = vunpack.c.h.b16 %v57
    %v374 = vunpack.c.l.b16 %v58
    %v375 = vunpack.c.h.b16 %v58
    %v376 = vunpack.c.l.b16 %v59
    %v377 = vunpack.c.h.b16 %v59
    %v378 = vunpack.c.l.b16 %v60
    %v379 = vunpack.c.h.b16 %v60
    %v380 = vunpack.c.l.b16 %v61
    %v381 = vunpack.c.h.b16 %v61
    %v382 = vunpack.c.l.b16 %v62
    %v383 = vunpack.c.h.b16 %v62
    %v384 = vunpack.c.l.b16 %v63
    %v385 = vunpack.c.h.b16 %v63
    %v386 = vunpack.c.l.b16 %v64
    %v387 = vunpack.c.h.b16 %v64
    %v388 = vunpack.c.l.b16 %v65
    %v389 = vunpack.c.h.b16 %v65
    %v390 = vunpack.c.l.b16 %v66
    %v391 = vunpack.c.h.b16 %v66
    %v392 = vunpack.c.l.b16 %v67
    %v393 = vunpack.c.h.b16 %v67
    %v394 = vunpack.c.l.b16 %v68
    %v395 = vunpack.c.h.b16 %v68
    %v396 = vunpack.c.l.b16 %v69
    %v397 = vunpack.c.h.b16 %v69
    %v398 = vunpack.c.l.b16 %v70
    %v399 = vunpack.c.h.b16 %v70
    %v400 = vunpack.c.l.b16 %v71
    %v401 = vunpack.c.h.b16 %v71
    %v402 = vunpack.c.l.b16 %v72
    %v403 = vunpack.c.h.b16 %v72
    %v404 = vunpack.c.l.b16 %v73
    %v405 = vunpack.c.h.b16 %v73
    %v406 = vunpack.c.l.b16 %v74
    %v407 = vunpack.c.h.b16 %v74
    %v408 = vunpack.c.l.b16 %v75
    %v409 = vunpack.c.h.b16 %v75
    %v410 = vunpack.c.l.b16 %v76
    %v411 = vunpack.c.h.b16 %v76
    %v412 = vunpack.c.l.b16 %v77
    %v413 = vunpack.c.h.b16 %v77
    %v414 = vunpack.c.l.b16 %v78
    %v415 = vunpack.c.h.b16 %v78
    %v416 = vunpack.c.l.b16 %v79
    %v417 = vunpack.c.h.b16 %v79
    %v418 = vunpack.c.l.b16 %v80
    %v419 = vunpack.c.h.b16 %v80
    %v420 = vunpack.c.l.b16 %v81
    %v421 = vunpack.c.h.b16 %v81
    %v422 = vunpack.c.l.b16 %v82
    %v423 = vunpack.c.h.b16 %v82
    %v424 = vunpack.c.l.b16 %v83
    %v425 = vunpack.c.h.b16 %v83
    %v426 = vunpack.c.l.b16 %v84
    %v427 = vunpack.c.h.b16 %v84
    %v428 = vunpack.c.l.b16 %v85
    %v429 = vunpack.c.h.b16 %v85
    %v430 = vunpack.c.l.b16 %v86
    %v431 = vunpack.c.h.b16 %v86
    %v432 = vunpack.c.l.b16 %v87
    %v433 = vunpack.c.h.b16 %v87
    %v434 = vunpack.c.l.b16 %v88
    %v435 = vunpack.c.h.b16 %v88
    %v436 = vunpack.c.l.b16 %v89
    %v437 = vunpack.c.h.b16 %v89
    %v438 = vunpack.c.l.b16 %v90
    %v439 = vunpack.c.h.b16 %v90
    %v440 = vunpack.c.l.b16 %v91
    %v441 = vunpack.c.h.b16 %v91
    %v442 = vunpack.c.l.b16 %v92
    %v443 = vunpack.c.h.b16 %v92
    %v444 = vunpack.c.l.b16 %v93
    %v445 = vunpack.c.h.b16 %v93
    %v446 = vunpack.c.l.b16 %v94
    %v447 = vunpack.c.h.b16 %v94
    %v448 = vunpack.c.l.b16 %v95
    %v449 = vunpack.c.h.b16 %v95
    %v450 = vunpack.c.l.b16 %v96
    %v451 = vunpack.c.h.b16 %v96
    %v452 = vunpack.c.l.b16 %v97
    %v453 = vunpack.c.h.b16 %v97
    %v454 = vunpack.c.l.b16 %v98
    %v455 = vunpack.c.h.b16 %v98
    %v456 = vunpack.c.l.b16 %v99
    %v457 = vunpack.c.h.b16 %v99
    %v458 = vunpack.c.l.b16 %v100
    %v459 = vunpack.c.h.b16 %v100
    %v460 = vunpack.c.l.b16 %v101
    %v461 = vunpack.c.h.b16 %v101
    %v462 = vunpack.c.l.b16 %v102
    %v463 = vunpack.c.h.b16 %v102
    %v464 = vunpack.c.l.b16 %v103
    %v465 = vunpack.c.h.b16 %v103
    %v466 = vunpack.c.l.b16 %v104
    %v467 = vunpack.c.h.b16 %v104
    %v468 = vunpack.c.l.b16 %v105
    %v469 = vunpack.c.h.b16 %v105
    %v470 = vunpack.c.l.b16 %v106
    %v471 = vunpack.c.h.b16 %v106
    %v472 = vunpack.c.l.b16 %v107
    %v473 = vunpack.c.h.b16 %v107
    %v474 = vunpack.c.l.b16 %v108
    %v475 = vunpack.c.h.b16 %v108
    %v476 = vunpack.c.l.b16 %v109
    %v477 = vunpack.c.h.b16 %v109
    %v478 = vunpack.c.l.b16 %v110
    %v479 = vunpack.c.h.b16 %v110
    %v480 = vunpack.c.l.b16 %v111
    %v481 = vunpack.c.h.b16 %v111
    %v482 = vunpack.c.l.b16 %v112
    %v483 = vunpack.c.h.b16 %v112
    %v484 = vunpack.c.l.b16 %v113
    %v485 = vunpack.c.h.b16 %v113
    %v486 = vunpack.c.l.b16 %v114
    %v487 = vunpack.c.h.b16 %v114
    %v488 = vunpack.c.l.b16 %v115
    %v489 = vunpack.c.h.b16 %v115
    %v490 = vunpack.c.l.b16 %v116
    %v491 = vunpack.c.h.b16 %v116
    %v492 = vunpack.c.l.b16 %v117
    %v493 = vunpack.c.h.b16 %v117
    %v494 = vunpack.c.l.b16 %v118
    %v495 = vunpack.c.h.b16 %v118
    %v496 = vunpack.c.l.b16 %v119
    %v497 = vunpack.c.h.b16 %v119
    %v498 = vunpack.c.l.b16 %v120
    %v499 = vunpack.c.h.b16 %v120
    %v500 = vunpack.c.l.b16 %v121
    %v501 = vunpack.c.h.b16 %v121
    %v502 = vunpack.c.l.b16 %v122
    %v503 = vunpack.c.h.b16 %v122
    %v504 = vunpack.c.l.b16 %v123
    %v505 = vunpack.c.h.b16 %v123
    %v506 = vunpack.c.l.b16 %v124
    %v507 = vunpack.c.h.b16 %v124
    %v508 = vunpack.c.l.b16 %v125
    %v509 = vunpack.c.h.b16 %v125
    %v510 = vunpack.c.l.b16 %v126
    %v511 = vunpack.c.h.b16 %v126
    %v512 = vunpack.c.l.b16 %v127
    %v513 = vunpack.c.h.b16 %v127
    %v514 = vunpack.c.l.b16 %v128
    %v515 = vunpack.c.h.b16 %v128
    %v516 = vunpack.c.l.b16 %v129
    %v517 = vunpack.c.h.b16 %v129
    %v518 = vunpack.c.l.b16 %v130
    %v519 = vunpack.c.h.b16 %v130
    %v520 = vunpack.c.l.b16 %v131
    %v521 = vunpack.c.h.b16 %v131
    %v522 = vunpack.c.l.b16 %v132
    %v523 = vunpack.c.h.b16 %v132
    %v524 = vunpack.c.l.b16 %v133
    %v525 = vunpack.c.h.b16 %v133
    %v526 = vunpack.c.l.b16 %v134
    %v527 = vunpack.c.h.b16 %v134
    %v528 = vunpack.c.l.b16 %v135
    %v529 = vunpack.c.h.b16 %v135
    %v530 = vunpack.c.l.b16 %v136
    %v531 = vunpack.c.h.b16 %v136
    %v532 = vunpack.c.l.b16 %v137
    %v533 = vunpack.c.h.b16 %v137
    %v534 = vunpack.c.l.b16 %v138
    %v535 = vunpack.c.h.b16 %v138
    %v536 = vunpack.c.l.b16 %v139
    %v537 = vunpack.c.h.b16 %v139
    %v538 = vunpack.c.l.b16 %v140
    %v539 = vunpack.c.h.b16 %v140
    %v540 = vunpack.c.l.b16 %v141
    %v541 = vunpack.c.h.b16 %v141
    %v542 = vunpack.c.l.b16 %v142
    %v543 = vunpack.c.h.b16 %v142
    %v544 = vunpack.c.l.b16 %v143
    %v545 = vunpack.c.h.b16 %v143
    %v546 = vunpack.c.l.b16 %v144
    %v547 = vunpack.c.h.b16 %v144
    %v548 = vunpack.c.l.b16 %v145
    %v549 = vunpack.c.h.b16 %v145
    %v550 = vunpack.c.l.b16 %v146
    %v551 = vunpack.c.h.b16 %v146
    %v552 = vunpack.c.l.b16 %v147
    %v553 = vunpack.c.h.b16 %v147
    %v554 = vunpack.c.l.b16 %v148
    %v555 = vunpack.c.h.b16 %v148
    %v556 = vunpack.c.l.b16 %v149
    %v557 = vunpack.c.h.b16 %v149
    %v558 = vunpack.c.l.b16 %v150
    %v559 = vunpack.c.h.b16 %v150
    %v560 = vunpack.c.l.b16 %v151
    %v561 = vunpack.c.h.b16 %v151
    %v562 = vunpack.c.l.b16 %v152
    %v563 = vunpack.c.h.b16 %v152
    %v564 = vunpack.c.l.b16 %v153
    %v565 = vunpack.c.h.b16 %v153
    %v566 = vunpack.c.l.b16 %v154
    %v567 = vunpack.c.h.b16 %v154
    %v568 = vunpack.c.l.b16 %v155
    %v569 = vunpack.c.h.b16 %v155
    %v570 = vunpack.c.l.b16 %v156
    %v571 = vunpack.c.h.b16 %v156
    %v572 = vunpack.c.l.b16 %v157
    %v573 = vunpack.c.h.b16 %v157
    %v574 = vunpack.c.l.b16 %v158
    %v575 = vunpack.c.h.b16 %v158
    %v576 = vunpack.c.l.b16 %v159
    %v577 = vunpack.c.h.b16 %v159
    %v578 = vunpack.c.l.b16 %v160
    %v579 = vunpack.c.h.b16 %v160
    %v580 = vunpack.c.l.b16 %v161
    %v581 = vunpack.c.h.b16 %v161
    %v582 = vunpack.c.l.b16 %v162
    %v583 = vunpack.c.h.b16 %v162
    %v584 = vunpack.c.l.b16 %v163
    %v585 = vunpack.c.h.b16 %v163
    %v586 = vunpack.c.l.b16 %v164
    %v587 = vunpack.c.h.b16 %v164
    %v588 = vunpack.c.l.b16 %v165
    %v589 = vunpack.c.h.b16 %v165
    %v590 = vunpack.c.l.b16 %v166
    %v591 = vunpack.c.h.b16 %v166
    %v592 = vunpack.c.l.b16 %v167
    %v593 = vunpack.c.h.b16 %v167
    %v594 = vunpack.c.l.b16 %v168
    %v595 = vunpack.c.h.b16 %v168
    %v596 = vunpack.c.l.b16 %v169
    %v597 = vunpack.c.h.b16 %v169
    %v598 = vunpack.c.l.b16 %v170
    %v599 = vunpack.c.h.b16 %v170
    %v600 = vunpack.c.l.b16 %v171
    %v601 = vunpack.c.h.b16 %v171
    %v602 = vunpack.c.l.b16 %v172
    %v603 = vunpack.c.h.b16 %v172
    %v604 = vunpack.c.l.b16 %v173
    %v605 = vunpack.c.h.b16 %v173
    %v606 = vunpack.c.l.b16 %v174
    %v607 = vunpack.c.h.b16 %v174
    %v608 = vunpack.c.l.b16 %v175
    %v609 = vunpack.c.h.b16 %v175
    %v610 = vunpack.c.l.b16 %v176
    %v611 = vunpack.c.h.b16 %v176
    %v612 = vunpack.c.l.b16 %v177
    %v613 = vunpack.c.h.b16 %v177
    %v614 = vunpack.c.l.b16 %v178
    %v615 = vunpack.c.h.b16 %v178
    %v616 = vunpack.c.l.b16 %v179
    %v617 = vunpack.c.h.b16 %v179
    %v618 = vpack.c.b16 %v342, %v330
    %v619 = vpack.c.b16 %v343, %v331
    %v620 = vpack.c.b16 %v344, %v332
    %v621 = vpack.c.b16 %v345, %v333
    %v622 = vpack.c.b16 %v346, %v334
    %v623 = vpack.c.b16 %v347, %v335
    %v624 = vpack.c.b16 %v348, %v336
    %v625 = vpack.c.b16 %v349, %v337
    %v626 = vpack.c.b16 %v350, %v338
    %v627 = vpack.c.b16 %v351, %v339
    %v628 = vpack.c.b16 %v352, %v340
    %v629 = vpack.c.b16 %v353, %v341
    %v630 = vpack.c.b16 %v366, %v354
    %v631 = vpack.c.b16 %v367, %v355
    %v632 = vpack.c.b16 %v368, %v356
    %v633 = vpack.c.b16 %v369, %v357
    %v634 = vpack.c.b16 %v370, %v358
    %v635 = vpack.c.b16 %v371, %v359
    %v636 = vpack.c.b16 %v372, %v360
    %v637 = vpack.c.b16 %v373, %v361
    %v638 = vpack.c.b16 %v374, %v362
    %v639 = vpack.c.b16 %v375, %v363
    %v640 = vpack.c.b16 %v376, %v364
    %v641 = vpack.c.b16 %v377, %v365
    %v642 = vpack.c.b16 %v390, %v378
    %v643 = vpack.c.b16 %v391, %v379
    %v644 = vpack.c.b16 %v392, %v380
    %v645 = vpack.c.b16 %v393, %v381
    %v646 = vpack.c.b16 %v394, %v382
    %v647 = vpack.c.b16 %v395, %v383
    %v648 = vpack.c.b16 %v396, %v384
    %v649 = vpack.c.b16 %v397, %v385
    %v650 = vpack.c.b16 %v398, %v386
    %v651 = vpack.c.b16 %v399, %v387
    %v652 = vpack.c.b16 %v400, %v388
    %v653 = vpack.c.b16 %v401, %v389
    %v654 = vpack.c.b16 %v414, %v402
    %v655 = vpack.c.b16 %v415, %v403
    %v656 = vpack.c.b16 %v416, %v404
    %v657 = vpack.c.b16 %v417, %v405
    %v658 = vpack.c.b16 %v418, %v406
    %v659 = vpack.c.b16 %v419, %v407
    %v660 = vpack.c.b16 %v420, %v408
    %v661 = vpack.c.b16 %v421, %v409
    %v662 = vpack.c.b16 %v422, %v410
    %v663 = vpack.c.b16 %v423, %v411
    %v664 = vpack.c.b16 %v424, %v412
    %v665 = vpack.c.b16 %v425, %v413
    %v666 = vpack.c.b16 %v438, %v426
    %v667 = vpack.c.b16 %v439, %v427
    %v668 = vpack.c.b16 %v440, %v428
    %v669 = vpack.c.b16 %v441, %v429
    %v670 = vpack.c.b16 %v442, %v430
    %v671 = vpack.c.b16 %v443, %v431
    %v672 = vpack.c.b16 %v444, %v432
    %v673 = vpack.c.b16 %v445, %v433
    %v674 = vpack.c.b16 %v446, %v434
    %v675 = vpack.c.b16 %v447, %v435
    %v676 = vpack.c.b16 %v448, %v436
    %v677 = vpack.c.b16 %v449, %v437
    %v678 = vpack.c.b16 %v462, %v450
    %v679 = vpack.c.b16 %v463, %v451
    %v680 = vpack.c.b16 %v464, %v452
    %v681 = vpack.c.b16 %v465, %v453
    %v682 = vpack.c.b16 %v466, %v454
    %v683 = vpack.c.b16 %v467, %v455
    %v684 = vpack.c.b16 %v468, %v456
    %v685 = vpack.c.b16 %v469, %v457
    %v686 = vpack.c.b16 %v470, %v458
    %v687 = vpack.c.b16 %v471, %v459
    %v688 = vpack.c.b16 %v472, %v460
    %v689 = vpack.c.b16 %v473, %v461
    %v690 = vpack.c.b16 %v486, %v474
    %v691 = vpack.c.b16 %v487, %v475
    %v692 = vpack.c.b16 %v488, %v476
    %v693 = vpack.c.b16 %v489, %v477
    %v694 = vpack.c.b16 %v490, %v478
    %v695 = vpack.c.b16 %v491, %v479
    %v696 = vpack.c.b16 %v492, %v480
    %v697 = vpack.c.b16 %v493, %v481
    %v698 = vpack.c.b16 %v494, %v482
    %v699 = vpack.c.b16 %v495, %v483
    %v700 = vpack.c.b16 %v496, %v484
    %v701 = vpack.c.b16 %v497, %v485
    %v702 = vpack.c.b16 %v510, %v498
    %v703 = vpack.c.b16 %v511, %v499
    %v704 = vpack.c.b16 %v512, %v500
    %v705 = vpack.c.b16 %v513, %v501
    %v706 = vpack.c.b16 %v514, %v502
    %v707 = vpack.c.b16 %v515, %v503
    %v708 = vpack.c.b16 %v516, %v504
    %v709 = vpack.c.b16 %v517, %v505
    %v710 = vpack.c.b16 %v518, %v506
    %v711 = vpack.c.b16 %v519, %v507
    %v712 = vpack.c.b16 %v520, %v508
    %v713 = vpack.c.b16 %v521, %v509
    %v714 = vpack.c.b16 %v534, %v522
    %v715 = vpack.c.b16 %v535, %v523
    %v716 = vpack.c.b16 %v536, %v524
    %v717 = vpack.c.b16 %v537, %v525
    %v718 = vpack.c.b16 %v538, %v526
    %v719 = vpack.c.b16 %v539, %v527
    %v720 = vpack.c.b16 %v540, %v528
    %v721 = vpack.c.b16 %v541, %v529
    %v722 = vpack.c.b16 %v542, %v530
    %v723 = vpack.c.b16 %v543, %v531
    %v724 = vpack.c.b16 %v544, %v532
    %v725 = vpack.c.b16 %v545, %v533
    %v726 = vpack.c.b16 %v558, %v546
    %v727 = vpack.c.b16 %v559, %v547
    %v728 = vpack.c.b16 %v560, %v548
    %v729 = vpack.c.b16 %v561, %v549
    %v730 = vpack.c.b16 %v562, %v550
    %v731 = vpack.c.b16 %v563, %v551
    %v732 = vpack.c.b16 %v564, %v552
    %v733 = vpack.c.b16 %v565, %v553
    %v734 = vpack.c.b16 %v566, %v554
    %v735 = vpack.c.b16 %v567, %v555
    %v736 = vpack.c.b16 %v568, %v556
    %v737 = vpack.c.b16 %v569, %v557
    %v738 = vpack.c.b16 %v582, %v570
    %v739 = vpack.c.b16 %v583, %v571
    %v740 = vpack.c.b16 %v584, %v572
    %v741 = vpack.c.b16 %v585, %v573
    %v742 = vpack.c.b16 %v586, %v574
    %v743 = vpack.c.b16 %v587, %v575
    %v744 = vpack.c.b16 %v588, %v576
    %v745 = vpack.c.b16 %v589, %v577
    %v746 = vpack.c.b16 %v590, %v578
    %v747 = vpack.c.b16 %v591, %v579
    %v748 = vpack.c.b16 %v592, %v580
    %v749 = vpack.c.b16 %v593, %v581
    %v750 = vpack.c.b16 %v606, %v594
    %v751 = vpack.c.b16 %v607, %v595
    %v752 = vpack.c.b16 %v608, %v596
    %v753 = vpack.c.b16 %v609, %v597
    %v754 = vpack.c.b16 %v610, %v598
    %v755 = vpack.c.b16 %v611, %v599
    %v756 = vpack.c.b16 %v612, %v600
    %v757 = vpack.c.b16 %v613, %v601
    %v758 = vpack.c.b16 %v614, %v602
    %v759 = vpack.c.b16 %v615, %v603
    %v760 = vpack.c.b16 %v616, %v604
    %v761 = vpack.c.b16 %v617, %v605
    %vm906 = vcmask 523264
    %v908 = vsel %vm906, %v184, 0
    %910 = vmatpush.bf16.msra.mxu0 %v702
    %911 = vmatpush.bf16.msra.mxu0 %v690
    %912 = vmatpush.bf16.msra.mxu0 %v678
    %913 = vmatpush.bf16.msra.mxu0 %v666
    %914 = vmatpush.bf16.msra.mxu0 %v654
    %915 = vmatpush.bf16.msra.mxu0 %v642
    %916 = vmatpush.bf16.msra.mxu0 %v630
    %917 = vmatpush.bf16.msra.mxu0 %v618
    %918 = vmatmul.bf16.gmra.mxu0 %v183
    %v919 = vpop.f32.mrf.mxu0
    %v920 = vadd.f32 0.0, %v919
    %v921 = vpop.f32.mrf.mxu0
    %922 = vdwg.mxu0
    %923 = vmatpush.bf16.msra.mxu0 0
    %924 = vmatpush.bf16.msra.mxu0 0
    %925 = vmatpush.bf16.msra.mxu0 0
    %926 = vmatpush.bf16.msra.mxu0 0
    %927 = vmatpush.bf16.msra.mxu0 %v750
    %928 = vmatpush.bf16.msra.mxu0 %v738
    %929 = vmatpush.bf16.msra.mxu0 %v726
    %930 = vmatpush.bf16.msra.mxu0 %v714
    %931 = vmatmul.bf16.gmra.mxu0 %v908
    %v932 = vpop.f32.mrf.mxu0
    %v933 = vadd.f32 %v920, %v932
    %v934 = vpop.f32.mrf.mxu0
    %935 = vdwg.mxu0
    %936 = vmatpush.bf16.msra.mxu0 %v703
    %937 = vmatpush.bf16.msra.mxu0 %v691
    %938 = vmatpush.bf16.msra.mxu0 %v679
    %939 = vmatpush.bf16.msra.mxu0 %v667
    %940 = vmatpush.bf16.msra.mxu0 %v655
    %941 = vmatpush.bf16.msra.mxu0 %v643
    %942 = vmatpush.bf16.msra.mxu0 %v631
    %943 = vmatpush.bf16.msra.mxu0 %v619
    %944 = vmatmul.bf16.gmra.mxu0 %v183
    %v945 = vpop.f32.mrf.mxu0
    %v946 = vadd.f32 0.0, %v945
    %v947 = vpop.f32.mrf.mxu0
    %948 = vdwg.mxu0
    %949 = vmatpush.bf16.msra.mxu0 0
    %950 = vmatpush.bf16.msra.mxu0 0
    %951 = vmatpush.bf16.msra.mxu0 0
    %952 = vmatpush.bf16.msra.mxu0 0
    %953 = vmatpush.bf16.msra.mxu0 %v751
    %954 = vmatpush.bf16.msra.mxu0 %v739
    %955 = vmatpush.bf16.msra.mxu0 %v727
    %956 = vmatpush.bf16.msra.mxu0 %v715
    %957 = vmatmul.bf16.gmra.mxu0 %v908
    %v958 = vpop.f32.mrf.mxu0
    %v959 = vadd.f32 %v946, %v958
    %v960 = vpop.f32.mrf.mxu0
    %961 = vdwg.mxu0
    %962 = vmatpush.bf16.msra.mxu0 %v704
    %963 = vmatpush.bf16.msra.mxu0 %v692
    %964 = vmatpush.bf16.msra.mxu0 %v680
    %965 = vmatpush.bf16.msra.mxu0 %v668
    %966 = vmatpush.bf16.msra.mxu0 %v656
    %967 = vmatpush.bf16.msra.mxu0 %v644
    %968 = vmatpush.bf16.msra.mxu0 %v632
    %969 = vmatpush.bf16.msra.mxu0 %v620
    %970 = vmatmul.bf16.gmra.mxu0 %v183
    %v971 = vpop.f32.mrf.mxu0
    %v972 = vadd.f32 0.0, %v971
    %v973 = vpop.f32.mrf.mxu0
    %974 = vdwg.mxu0
    %975 = vmatpush.bf16.msra.mxu0 0
    %976 = vmatpush.bf16.msra.mxu0 0
    %977 = vmatpush.bf16.msra.mxu0 0
    %978 = vmatpush.bf16.msra.mxu0 0
    %979 = vmatpush.bf16.msra.mxu0 %v752
    %980 = vmatpush.bf16.msra.mxu0 %v740
    %981 = vmatpush.bf16.msra.mxu0 %v728
    %982 = vmatpush.bf16.msra.mxu0 %v716
    %983 = vmatmul.bf16.gmra.mxu0 %v908
    %v984 = vpop.f32.mrf.mxu0
    %v985 = vadd.f32 %v972, %v984
    %v986 = vpop.f32.mrf.mxu0
    %987 = vdwg.mxu0
    %988 = vmatpush.bf16.msra.mxu0 %v705
    %989 = vmatpush.bf16.msra.mxu0 %v693
    %990 = vmatpush.bf16.msra.mxu0 %v681
    %991 = vmatpush.bf16.msra.mxu0 %v669
    %992 = vmatpush.bf16.msra.mxu0 %v657
    %993 = vmatpush.bf16.msra.mxu0 %v645
    %994 = vmatpush.bf16.msra.mxu0 %v633
    %995 = vmatpush.bf16.msra.mxu0 %v621
    %996 = vmatmul.bf16.gmra.mxu0 %v183
    %v997 = vpop.f32.mrf.mxu0
    %v998 = vadd.f32 0.0, %v997
    %v999 = vpop.f32.mrf.mxu0
    %1000 = vdwg.mxu0
    %1001 = vmatpush.bf16.msra.mxu0 0
    %1002 = vmatpush.bf16.msra.mxu0 0
    %1003 = vmatpush.bf16.msra.mxu0 0
    %1004 = vmatpush.bf16.msra.mxu0 0
    %1005 = vmatpush.bf16.msra.mxu0 %v753
    %1006 = vmatpush.bf16.msra.mxu0 %v741
    %1007 = vmatpush.bf16.msra.mxu0 %v729
    %1008 = vmatpush.bf16.msra.mxu0 %v717
    %1009 = vmatmul.bf16.gmra.mxu0 %v908
    %v1010 = vpop.f32.mrf.mxu0
    %v1011 = vadd.f32 %v998, %v1010
    %v1012 = vpop.f32.mrf.mxu0
    %1013 = vdwg.mxu0
    %1014 = vmatpush.bf16.msra.mxu0 %v706
    %1015 = vmatpush.bf16.msra.mxu0 %v694
    %1016 = vmatpush.bf16.msra.mxu0 %v682
    %1017 = vmatpush.bf16.msra.mxu0 %v670
    %1018 = vmatpush.bf16.msra.mxu0 %v658
    %1019 = vmatpush.bf16.msra.mxu0 %v646
    %1020 = vmatpush.bf16.msra.mxu0 %v634
    %1021 = vmatpush.bf16.msra.mxu0 %v622
    %1022 = vmatmul.bf16.gmra.mxu0 %v183
    %v1023 = vpop.f32.mrf.mxu0
    %v1024 = vadd.f32 0.0, %v1023
    %v1025 = vpop.f32.mrf.mxu0
    %1026 = vdwg.mxu0
    %1027 = vmatpush.bf16.msra.mxu0 0
    %1028 = vmatpush.bf16.msra.mxu0 0
    %1029 = vmatpush.bf16.msra.mxu0 0
    %1030 = vmatpush.bf16.msra.mxu0 0
    %1031 = vmatpush.bf16.msra.mxu0 %v754
    %1032 = vmatpush.bf16.msra.mxu0 %v742
    %1033 = vmatpush.bf16.msra.mxu0 %v730
    %1034 = vmatpush.bf16.msra.mxu0 %v718
    %1035 = vmatmul.bf16.gmra.mxu0 %v908
    %v1036 = vpop.f32.mrf.mxu0
    %v1037 = vadd.f32 %v1024, %v1036
    %v1038 = vpop.f32.mrf.mxu0
    %1039 = vdwg.mxu0
    %1040 = vmatpush.bf16.msra.mxu0 %v707
    %1041 = vmatpush.bf16.msra.mxu0 %v695
    %1042 = vmatpush.bf16.msra.mxu0 %v683
    %1043 = vmatpush.bf16.msra.mxu0 %v671
    %1044 = vmatpush.bf16.msra.mxu0 %v659
    %1045 = vmatpush.bf16.msra.mxu0 %v647
    %1046 = vmatpush.bf16.msra.mxu0 %v635
    %1047 = vmatpush.bf16.msra.mxu0 %v623
    %1048 = vmatmul.bf16.gmra.mxu0 %v183
    %v1049 = vpop.f32.mrf.mxu0
    %v1050 = vadd.f32 0.0, %v1049
    %v1051 = vpop.f32.mrf.mxu0
    %1052 = vdwg.mxu0
    %1053 = vmatpush.bf16.msra.mxu0 0
    %1054 = vmatpush.bf16.msra.mxu0 0
    %1055 = vmatpush.bf16.msra.mxu0 0
    %1056 = vmatpush.bf16.msra.mxu0 0
    %1057 = vmatpush.bf16.msra.mxu0 %v755
    %1058 = vmatpush.bf16.msra.mxu0 %v743
    %1059 = vmatpush.bf16.msra.mxu0 %v731
    %1060 = vmatpush.bf16.msra.mxu0 %v719
    %1061 = vmatmul.bf16.gmra.mxu0 %v908
    %v1062 = vpop.f32.mrf.mxu0
    %v1063 = vadd.f32 %v1050, %v1062
    %v1064 = vpop.f32.mrf.mxu0
    %1065 = vdwg.mxu0
    %1066 = vmatpush.bf16.msra.mxu0 %v708
    %1067 = vmatpush.bf16.msra.mxu0 %v696
    %1068 = vmatpush.bf16.msra.mxu0 %v684
    %1069 = vmatpush.bf16.msra.mxu0 %v672
    %1070 = vmatpush.bf16.msra.mxu0 %v660
    %1071 = vmatpush.bf16.msra.mxu0 %v648
    %1072 = vmatpush.bf16.msra.mxu0 %v636
    %1073 = vmatpush.bf16.msra.mxu0 %v624
    %1074 = vmatmul.bf16.gmra.mxu0 %v183
    %v1075 = vpop.f32.mrf.mxu0
    %v1076 = vadd.f32 0.0, %v1075
    %v1077 = vpop.f32.mrf.mxu0
    %1078 = vdwg.mxu0
    %1079 = vmatpush.bf16.msra.mxu0 0
    %1080 = vmatpush.bf16.msra.mxu0 0
    %1081 = vmatpush.bf16.msra.mxu0 0
    %1082 = vmatpush.bf16.msra.mxu0 0
    %1083 = vmatpush.bf16.msra.mxu0 %v756
    %1084 = vmatpush.bf16.msra.mxu0 %v744
    %1085 = vmatpush.bf16.msra.mxu0 %v732
    %1086 = vmatpush.bf16.msra.mxu0 %v720
    %1087 = vmatmul.bf16.gmra.mxu0 %v908
    %v1088 = vpop.f32.mrf.mxu0
    %v1089 = vadd.f32 %v1076, %v1088
    %v1090 = vpop.f32.mrf.mxu0
    %1091 = vdwg.mxu0
    %1092 = vmatpush.bf16.msra.mxu0 %v709
    %1093 = vmatpush.bf16.msra.mxu0 %v697
    %1094 = vmatpush.bf16.msra.mxu0 %v685
    %1095 = vmatpush.bf16.msra.mxu0 %v673
    %1096 = vmatpush.bf16.msra.mxu0 %v661
    %1097 = vmatpush.bf16.msra.mxu0 %v649
    %1098 = vmatpush.bf16.msra.mxu0 %v637
    %1099 = vmatpush.bf16.msra.mxu0 %v625
    %1100 = vmatmul.bf16.gmra.mxu0 %v183
    %v1101 = vpop.f32.mrf.mxu0
    %v1102 = vadd.f32 0.0, %v1101
    %v1103 = vpop.f32.mrf.mxu0
    %1104 = vdwg.mxu0
    %1105 = vmatpush.bf16.msra.mxu0 0
    %1106 = vmatpush.bf16.msra.mxu0 0
    %1107 = vmatpush.bf16.msra.mxu0 0
    %1108 = vmatpush.bf16.msra.mxu0 0
    %1109 = vmatpush.bf16.msra.mxu0 %v757
    %1110 = vmatpush.bf16.msra.mxu0 %v745
    %1111 = vmatpush.bf16.msra.mxu0 %v733
    %1112 = vmatpush.bf16.msra.mxu0 %v721
    %1113 = vmatmul.bf16.gmra.mxu0 %v908
    %v1114 = vpop.f32.mrf.mxu0
    %v1115 = vadd.f32 %v1102, %v1114
    %v1116 = vpop.f32.mrf.mxu0
    %1117 = vdwg.mxu0
    %1118 = vmatpush.bf16.msra.mxu0 %v710
    %1119 = vmatpush.bf16.msra.mxu0 %v698
    %1120 = vmatpush.bf16.msra.mxu0 %v686
    %1121 = vmatpush.bf16.msra.mxu0 %v674
    %1122 = vmatpush.bf16.msra.mxu0 %v662
    %1123 = vmatpush.bf16.msra.mxu0 %v650
    %1124 = vmatpush.bf16.msra.mxu0 %v638
    %1125 = vmatpush.bf16.msra.mxu0 %v626
    %1126 = vmatmul.bf16.gmra.mxu0 %v183
    %v1127 = vpop.f32.mrf.mxu0
    %v1128 = vadd.f32 0.0, %v1127
    %v1129 = vpop.f32.mrf.mxu0
    %1130 = vdwg.mxu0
    %1131 = vmatpush.bf16.msra.mxu0 0
    %1132 = vmatpush.bf16.msra.mxu0 0
    %1133 = vmatpush.bf16.msra.mxu0 0
    %1134 = vmatpush.bf16.msra.mxu0 0
    %1135 = vmatpush.bf16.msra.mxu0 %v758
    %1136 = vmatpush.bf16.msra.mxu0 %v746
    %1137 = vmatpush.bf16.msra.mxu0 %v734
    %1138 = vmatpush.bf16.msra.mxu0 %v722
    %1139 = vmatmul.bf16.gmra.mxu0 %v908
    %v1140 = vpop.f32.mrf.mxu0
    %v1141 = vadd.f32 %v1128, %v1140
    %v1142 = vpop.f32.mrf.mxu0
    %1143 = vdwg.mxu0
    %1144 = vmatpush.bf16.msra.mxu0 %v711
    %1145 = vmatpush.bf16.msra.mxu0 %v699
    %1146 = vmatpush.bf16.msra.mxu0 %v687
    %1147 = vmatpush.bf16.msra.mxu0 %v675
    %1148 = vmatpush.bf16.msra.mxu0 %v663
    %1149 = vmatpush.bf16.msra.mxu0 %v651
    %1150 = vmatpush.bf16.msra.mxu0 %v639
    %1151 = vmatpush.bf16.msra.mxu0 %v627
    %1152 = vmatmul.bf16.gmra.mxu0 %v183
    %v1153 = vpop.f32.mrf.mxu0
    %v1154 = vadd.f32 0.0, %v1153
    %v1155 = vpop.f32.mrf.mxu0
    %1156 = vdwg.mxu0
    %1157 = vmatpush.bf16.msra.mxu0 0
    %1158 = vmatpush.bf16.msra.mxu0 0
    %1159 = vmatpush.bf16.msra.mxu0 0
    %1160 = vmatpush.bf16.msra.mxu0 0
    %1161 = vmatpush.bf16.msra.mxu0 %v759
    %1162 = vmatpush.bf16.msra.mxu0 %v747
    %1163 = vmatpush.bf16.msra.mxu0 %v735
    %1164 = vmatpush.bf16.msra.mxu0 %v723
    %1165 = vmatmul.bf16.gmra.mxu0 %v908
    %v1166 = vpop.f32.mrf.mxu0
    %v1167 = vadd.f32 %v1154, %v1166
    %v1168 = vpop.f32.mrf.mxu0
    %1169 = vdwg.mxu0
    %1170 = vmatpush.bf16.msra.mxu0 %v712
    %1171 = vmatpush.bf16.msra.mxu0 %v700
    %1172 = vmatpush.bf16.msra.mxu0 %v688
    %1173 = vmatpush.bf16.msra.mxu0 %v676
    %1174 = vmatpush.bf16.msra.mxu0 %v664
    %1175 = vmatpush.bf16.msra.mxu0 %v652
    %1176 = vmatpush.bf16.msra.mxu0 %v640
    %1177 = vmatpush.bf16.msra.mxu0 %v628
    %1178 = vmatmul.bf16.gmra.mxu0 %v183
    %v1179 = vpop.f32.mrf.mxu0
    %v1180 = vadd.f32 0.0, %v1179
    %v1181 = vpop.f32.mrf.mxu0
    %1182 = vdwg.mxu0
    %1183 = vmatpush.bf16.msra.mxu0 0
    %1184 = vmatpush.bf16.msra.mxu0 0
    %1185 = vmatpush.bf16.msra.mxu0 0
    %1186 = vmatpush.bf16.msra.mxu0 0
    %1187 = vmatpush.bf16.msra.mxu0 %v760
    %1188 = vmatpush.bf16.msra.mxu0 %v748
    %1189 = vmatpush.bf16.msra.mxu0 %v736
    %1190 = vmatpush.bf16.msra.mxu0 %v724
    %1191 = vmatmul.bf16.gmra.mxu0 %v908
    %v1192 = vpop.f32.mrf.mxu0
    %v1193 = vadd.f32 %v1180, %v1192
    %v1194 = vpop.f32.mrf.mxu0
    %1195 = vdwg.mxu0
    %1196 = vmatpush.bf16.msra.mxu0 %v713
    %1197 = vmatpush.bf16.msra.mxu0 %v701
    %1198 = vmatpush.bf16.msra.mxu0 %v689
    %1199 = vmatpush.bf16.msra.mxu0 %v677
    %1200 = vmatpush.bf16.msra.mxu0 %v665
    %1201 = vmatpush.bf16.msra.mxu0 %v653
    %1202 = vmatpush.bf16.msra.mxu0 %v641
    %1203 = vmatpush.bf16.msra.mxu0 %v629
    %1204 = vmatmul.bf16.gmra.mxu0 %v183
    %v1205 = vpop.f32.mrf.mxu0
    %v1206 = vadd.f32 0.0, %v1205
    %v1207 = vpop.f32.mrf.mxu0
    %1208 = vdwg.mxu0
    %1209 = vmatpush.bf16.msra.mxu0 0
    %1210 = vmatpush.bf16.msra.mxu0 0
    %1211 = vmatpush.bf16.msra.mxu0 0
    %1212 = vmatpush.bf16.msra.mxu0 0
    %1213 = vmatpush.bf16.msra.mxu0 %v761
    %1214 = vmatpush.bf16.msra.mxu0 %v749
    %1215 = vmatpush.bf16.msra.mxu0 %v737
    %1216 = vmatpush.bf16.msra.mxu0 %v725
    %1217 = vmatmul.bf16.gmra.mxu0 %v908
    %v1218 = vpop.f32.mrf.mxu0
    %v1219 = vadd.f32 %v1206, %v1218
    %v1220 = vpop.f32.mrf.mxu0
    %1221 = vdwg.mxu0
    %v1222 = vld [vmem:[%s1] sm:$0xff]
    %v1223 = vld [vmem:[%s1 + $0x8] sm:$0xff]
    %v1224 = vld [vmem:[%s1 + $0x10] sm:$0xff]
    %v1225 = vld [vmem:[%s1 + $0x18] sm:$0xff]
    %v1226 = vld [vmem:[%s1 + $0x20] sm:$0xff]
    %v1227 = vld [vmem:[%s1 + $0x28] sm:$0xff]
    %v1228 = vld [vmem:[%s1 + $0x30] sm:$0xff]
    %v1229 = vld [vmem:[%s1 + $0x38] sm:$0xff]
    %v1230 = vld [vmem:[%s1 + $0x40] sm:$0xff]
    %v1231 = vld [vmem:[%s1 + $0x48] sm:$0xff]
    %v1232 = vld [vmem:[%s1 + $0x50] sm:$0xff]
    %v1233 = vld [vmem:[%s1 + $0x58] sm:$0xff]
    %v1234 = vld [vmem:[%s1 + $0x60] sm:$0xff]
    %v1235 = vld [vmem:[%s1 + $0x68] sm:$0xff]
    %v1236 = vld [vmem:[%s1 + $0x70] sm:$0xff]
    %v1237 = vld [vmem:[%s1 + $0x78] sm:$0xff]
    %v1238 = vld [vmem:[%s3] sm:$0xff]
    %v1239 = vld [vmem:[%s3 + $0x8] sm:$0xff]
    %v1240 = vld [vmem:[%s3 + $0x10] sm:$0xff]
    %v1241 = vld [vmem:[%s3 + $0x18] sm:$0xff]
    %v1242 = vld [vmem:[%s3 + $0x20] sm:$0xff]
    %v1243 = vld [vmem:[%s3 + $0x28] sm:$0xff]
    %v1244 = vld [vmem:[%s3 + $0x30] sm:$0xff]
    %v1245 = vld [vmem:[%s3 + $0x38] sm:$0xff]
    %v1246 = vld [vmem:[%s3 + $0x40] sm:$0xff]
    %v1247 = vld [vmem:[%s3 + $0x48] sm:$0xff]
    %v1248 = vld [vmem:[%s3 + $0x50] sm:$0xff]
    %v1249 = vld [vmem:[%s3 + $0x58] sm:$0xff]
    %v1250 = vld [vmem:[%s3 + $0x60] sm:$0xff]
    %v1251 = vld [vmem:[%s3 + $0x68] sm:$0xff]
    %v1252 = vld [vmem:[%s3 + $0x70] sm:$0xff]
    %v1253 = vld [vmem:[%s3 + $0x78] sm:$0xff]
    %vm1254 = vcmask 261120
    %v1256 = vsel %vm1254, %v1222, 0
    %v1259 = vsel %vm1254, %v1223, 0
    %v1262 = vsel %vm1254, %v1224, 0
    %v1265 = vsel %vm1254, %v1225, 0
    %v1268 = vsel %vm1254, %v1226, 0
    %v1271 = vsel %vm1254, %v1227, 0
    %v1274 = vsel %vm1254, %v1228, 0
    %v1277 = vsel %vm1254, %v1229, 0
    %v1280 = vsel %vm1254, %v1230, 0
    %v1283 = vsel %vm1254, %v1231, 0
    %v1286 = vsel %vm1254, %v1232, 0
    %v1289 = vsel %vm1254, %v1233, 0
    %v1292 = vsel %vm1254, %v1234, 0
    %v1295 = vsel %vm1254, %v1235, 0
    %v1298 = vsel %vm1254, %v1236, 0
    %v1301 = vsel %vm1254, %v1237, 0
    %1303 = vmatpush.msra.mxu0 0.0
    %1304 = vmatpush.msra.mxu0 0.0
    %1305 = vmatpush.msra.mxu0 0.0
    %1306 = vmatpush.msra.mxu0 0.0
    %1307 = vmatpush.msra.mxu0 0.0
    %1308 = vmatpush.msra.mxu0 0.0
    %1309 = vmatpush.msra.mxu0 0.0
    %1310 = vmatpush.msra.mxu0 0.0
    %1311 = vmatpush.msra.mxu0 0.0
    %1312 = vmatpush.msra.mxu0 0.0
    %1313 = vmatpush.msra.mxu0 0.0
    %1314 = vmatpush.msra.mxu0 0.0
    %1315 = vmatpush.msra.mxu0 %v1250
    %1316 = vmatpush.msra.mxu0 %v1246
    %1317 = vmatpush.msra.mxu0 %v1242
    %1318 = vmatpush.msra.mxu0 %v1238
    %1319 = vmatmul.f32.gmra.mxu0 %v1256
    %v1320 = vpop.f32.mrf.mxu0
    %v1321 = vadd.f32 0.0, %v1320
    %1322 = vmatmul.f32.gmra.mxu0 %v1259
    %v1323 = vpop.f32.mrf.mxu0
    %v1324 = vadd.f32 0.0, %v1323
    %1325 = vmatmul.f32.gmra.mxu0 %v1262
    %v1326 = vpop.f32.mrf.mxu0
    %v1327 = vadd.f32 0.0, %v1326
    %1328 = vmatmul.f32.gmra.mxu0 %v1265
    %v1329 = vpop.f32.mrf.mxu0
    %v1330 = vadd.f32 0.0, %v1329
    %1331 = vmatmul.f32.gmra.mxu0 %v1268
    %v1332 = vpop.f32.mrf.mxu0
    %v1333 = vadd.f32 0.0, %v1332
    %1334 = vmatmul.f32.gmra.mxu0 %v1271
    %v1335 = vpop.f32.mrf.mxu0
    %v1336 = vadd.f32 0.0, %v1335
    %1337 = vmatmul.f32.gmra.mxu0 %v1274
    %v1338 = vpop.f32.mrf.mxu0
    %v1339 = vadd.f32 0.0, %v1338
    %1340 = vmatmul.f32.gmra.mxu0 %v1277
    %v1341 = vpop.f32.mrf.mxu0
    %v1342 = vadd.f32 0.0, %v1341
    %1343 = vmatmul.f32.gmra.mxu0 %v1280
    %v1344 = vpop.f32.mrf.mxu0
    %v1345 = vadd.f32 0.0, %v1344
    %1346 = vmatmul.f32.gmra.mxu0 %v1283
    %v1347 = vpop.f32.mrf.mxu0
    %v1348 = vadd.f32 0.0, %v1347
    %1349 = vmatmul.f32.gmra.mxu0 %v1286
    %v1350 = vpop.f32.mrf.mxu0
    %v1351 = vadd.f32 0.0, %v1350
    %1352 = vmatmul.f32.gmra.mxu0 %v1289
    %v1353 = vpop.f32.mrf.mxu0
    %v1354 = vadd.f32 0.0, %v1353
    %1355 = vmatmul.f32.gmra.mxu0 %v1292
    %v1356 = vpop.f32.mrf.mxu0
    %1357 = vmatmul.f32.gmra.mxu0 %v1295
    %v1358 = vpop.f32.mrf.mxu0
    %1359 = vmatmul.f32.gmra.mxu0 %v1298
    %v1360 = vpop.f32.mrf.mxu0
    %1361 = vmatmul.f32.gmra.mxu0 %v1301
    %v1362 = vpop.f32.mrf.mxu0
    %1363 = vdwg.mxu0
    %1364 = vmatpush.msra.mxu0 0.0
    %1365 = vmatpush.msra.mxu0 0.0
    %1366 = vmatpush.msra.mxu0 0.0
    %1367 = vmatpush.msra.mxu0 0.0
    %1368 = vmatpush.msra.mxu0 0.0
    %1369 = vmatpush.msra.mxu0 0.0
    %1370 = vmatpush.msra.mxu0 0.0
    %1371 = vmatpush.msra.mxu0 0.0
    %1372 = vmatpush.msra.mxu0 0.0
    %1373 = vmatpush.msra.mxu0 0.0
    %1374 = vmatpush.msra.mxu0 0.0
    %1375 = vmatpush.msra.mxu0 0.0
    %1376 = vmatpush.msra.mxu0 %v1251
    %1377 = vmatpush.msra.mxu0 %v1247
    %1378 = vmatpush.msra.mxu0 %v1243
    %1379 = vmatpush.msra.mxu0 %v1239
    %1380 = vmatmul.f32.gmra.mxu0 %v1256
    %v1381 = vpop.f32.mrf.mxu0
    %v1382 = vadd.f32 0.0, %v1381
    %1383 = vmatmul.f32.gmra.mxu0 %v1259
    %v1384 = vpop.f32.mrf.mxu0
    %v1385 = vadd.f32 0.0, %v1384
    %1386 = vmatmul.f32.gmra.mxu0 %v1262
    %v1387 = vpop.f32.mrf.mxu0
    %v1388 = vadd.f32 0.0, %v1387
    %1389 = vmatmul.f32.gmra.mxu0 %v1265
    %v1390 = vpop.f32.mrf.mxu0
    %v1391 = vadd.f32 0.0, %v1390
    %1392 = vmatmul.f32.gmra.mxu0 %v1268
    %v1393 = vpop.f32.mrf.mxu0
    %v1394 = vadd.f32 0.0, %v1393
    %1395 = vmatmul.f32.gmra.mxu0 %v1271
    %v1396 = vpop.f32.mrf.mxu0
    %v1397 = vadd.f32 0.0, %v1396
    %1398 = vmatmul.f32.gmra.mxu0 %v1274
    %v1399 = vpop.f32.mrf.mxu0
    %v1400 = vadd.f32 0.0, %v1399
    %1401 = vmatmul.f32.gmra.mxu0 %v1277
    %v1402 = vpop.f32.mrf.mxu0
    %v1403 = vadd.f32 0.0, %v1402
    %1404 = vmatmul.f32.gmra.mxu0 %v1280
    %v1405 = vpop.f32.mrf.mxu0
    %v1406 = vadd.f32 0.0, %v1405
    %1407 = vmatmul.f32.gmra.mxu0 %v1283
    %v1408 = vpop.f32.mrf.mxu0
    %v1409 = vadd.f32 0.0, %v1408
    %1410 = vmatmul.f32.gmra.mxu0 %v1286
    %v1411 = vpop.f32.mrf.mxu0
    %v1412 = vadd.f32 0.0, %v1411
    %1413 = vmatmul.f32.gmra.mxu0 %v1289
    %v1414 = vpop.f32.mrf.mxu0
    %v1415 = vadd.f32 0.0, %v1414
    %1416 = vmatmul.f32.gmra.mxu0 %v1292
    %v1417 = vpop.f32.mrf.mxu0
    %1418 = vmatmul.f32.gmra.mxu0 %v1295
    %v1419 = vpop.f32.mrf.mxu0
    %1420 = vmatmul.f32.gmra.mxu0 %v1298
    %v1421 = vpop.f32.mrf.mxu0
    %1422 = vmatmul.f32.gmra.mxu0 %v1301
    %v1423 = vpop.f32.mrf.mxu0
    %1424 = vdwg.mxu0
    %1425 = vmatpush.msra.mxu0 0.0
    %1426 = vmatpush.msra.mxu0 0.0
    %1427 = vmatpush.msra.mxu0 0.0
    %1428 = vmatpush.msra.mxu0 0.0
    %1429 = vmatpush.msra.mxu0 0.0
    %1430 = vmatpush.msra.mxu0 0.0
    %1431 = vmatpush.msra.mxu0 0.0
    %1432 = vmatpush.msra.mxu0 0.0
    %1433 = vmatpush.msra.mxu0 0.0
    %1434 = vmatpush.msra.mxu0 0.0
    %1435 = vmatpush.msra.mxu0 0.0
    %1436 = vmatpush.msra.mxu0 0.0
    %1437 = vmatpush.msra.mxu0 %v1252
    %1438 = vmatpush.msra.mxu0 %v1248
    %1439 = vmatpush.msra.mxu0 %v1244
    %1440 = vmatpush.msra.mxu0 %v1240
    %1441 = vmatmul.f32.gmra.mxu0 %v1256
    %v1442 = vpop.f32.mrf.mxu0
    %v1443 = vadd.f32 0.0, %v1442
    %1444 = vmatmul.f32.gmra.mxu0 %v1259
    %v1445 = vpop.f32.mrf.mxu0
    %v1446 = vadd.f32 0.0, %v1445
    %1447 = vmatmul.f32.gmra.mxu0 %v1262
    %v1448 = vpop.f32.mrf.mxu0
    %v1449 = vadd.f32 0.0, %v1448
    %1450 = vmatmul.f32.gmra.mxu0 %v1265
    %v1451 = vpop.f32.mrf.mxu0
    %v1452 = vadd.f32 0.0, %v1451
    %1453 = vmatmul.f32.gmra.mxu0 %v1268
    %v1454 = vpop.f32.mrf.mxu0
    %v1455 = vadd.f32 0.0, %v1454
    %1456 = vmatmul.f32.gmra.mxu0 %v1271
    %v1457 = vpop.f32.mrf.mxu0
    %v1458 = vadd.f32 0.0, %v1457
    %1459 = vmatmul.f32.gmra.mxu0 %v1274
    %v1460 = vpop.f32.mrf.mxu0
    %v1461 = vadd.f32 0.0, %v1460
    %1462 = vmatmul.f32.gmra.mxu0 %v1277
    %v1463 = vpop.f32.mrf.mxu0
    %v1464 = vadd.f32 0.0, %v1463
    %1465 = vmatmul.f32.gmra.mxu0 %v1280
    %v1466 = vpop.f32.mrf.mxu0
    %v1467 = vadd.f32 0.0, %v1466
    %1468 = vmatmul.f32.gmra.mxu0 %v1283
    %v1469 = vpop.f32.mrf.mxu0
    %v1470 = vadd.f32 0.0, %v1469
    %1471 = vmatmul.f32.gmra.mxu0 %v1286
    %v1472 = vpop.f32.mrf.mxu0
    %v1473 = vadd.f32 0.0, %v1472
    %1474 = vmatmul.f32.gmra.mxu0 %v1289
    %v1475 = vpop.f32.mrf.mxu0
    %v1476 = vadd.f32 0.0, %v1475
    %1477 = vmatmul.f32.gmra.mxu0 %v1292
    %v1478 = vpop.f32.mrf.mxu0
    %1479 = vmatmul.f32.gmra.mxu0 %v1295
    %v1480 = vpop.f32.mrf.mxu0
    %1481 = vmatmul.f32.gmra.mxu0 %v1298
    %v1482 = vpop.f32.mrf.mxu0
    %1483 = vmatmul.f32.gmra.mxu0 %v1301
    %v1484 = vpop.f32.mrf.mxu0
    %1485 = vdwg.mxu0
    %1486 = vmatpush.msra.mxu0 0.0
    %1487 = vmatpush.msra.mxu0 0.0
    %1488 = vmatpush.msra.mxu0 0.0
    %1489 = vmatpush.msra.mxu0 0.0
    %1490 = vmatpush.msra.mxu0 0.0
    %1491 = vmatpush.msra.mxu0 0.0
    %1492 = vmatpush.msra.mxu0 0.0
    %1493 = vmatpush.msra.mxu0 0.0
    %1494 = vmatpush.msra.mxu0 0.0
    %1495 = vmatpush.msra.mxu0 0.0
    %1496 = vmatpush.msra.mxu0 0.0
    %1497 = vmatpush.msra.mxu0 0.0
    %1498 = vmatpush.msra.mxu0 %v1253
    %1499 = vmatpush.msra.mxu0 %v1249
    %1500 = vmatpush.msra.mxu0 %v1245
    %1501 = vmatpush.msra.mxu0 %v1241
    %1502 = vmatmul.f32.gmra.mxu0 %v1256
    %v1503 = vpop.f32.mrf.mxu0
    %v1504 = vadd.f32 0.0, %v1503
    %1505 = vmatmul.f32.gmra.mxu0 %v1259
    %v1506 = vpop.f32.mrf.mxu0
    %v1507 = vadd.f32 0.0, %v1506
    %1508 = vmatmul.f32.gmra.mxu0 %v1262
    %v1509 = vpop.f32.mrf.mxu0
    %v1510 = vadd.f32 0.0, %v1509
    %1511 = vmatmul.f32.gmra.mxu0 %v1265
    %v1512 = vpop.f32.mrf.mxu0
    %v1513 = vadd.f32 0.0, %v1512
    %1514 = vmatmul.f32.gmra.mxu0 %v1268
    %v1515 = vpop.f32.mrf.mxu0
    %v1516 = vadd.f32 0.0, %v1515
    %1517 = vmatmul.f32.gmra.mxu0 %v1271
    %v1518 = vpop.f32.mrf.mxu0
    %v1519 = vadd.f32 0.0, %v1518
    %1520 = vmatmul.f32.gmra.mxu0 %v1274
    %v1521 = vpop.f32.mrf.mxu0
    %v1522 = vadd.f32 0.0, %v1521
    %1523 = vmatmul.f32.gmra.mxu0 %v1277
    %v1524 = vpop.f32.mrf.mxu0
    %v1525 = vadd.f32 0.0, %v1524
    %1526 = vmatmul.f32.gmra.mxu0 %v1280
    %v1527 = vpop.f32.mrf.mxu0
    %v1528 = vadd.f32 0.0, %v1527
    %1529 = vmatmul.f32.gmra.mxu0 %v1283
    %v1530 = vpop.f32.mrf.mxu0
    %v1531 = vadd.f32 0.0, %v1530
    %1532 = vmatmul.f32.gmra.mxu0 %v1286
    %v1533 = vpop.f32.mrf.mxu0
    %v1534 = vadd.f32 0.0, %v1533
    %1535 = vmatmul.f32.gmra.mxu0 %v1289
    %v1536 = vpop.f32.mrf.mxu0
    %v1537 = vadd.f32 0.0, %v1536
    %1538 = vmatmul.f32.gmra.mxu0 %v1292
    %v1539 = vpop.f32.mrf.mxu0
    %1540 = vmatmul.f32.gmra.mxu0 %v1295
    %v1541 = vpop.f32.mrf.mxu0
    %1542 = vmatmul.f32.gmra.mxu0 %v1298
    %v1543 = vpop.f32.mrf.mxu0
    %1544 = vmatmul.f32.gmra.mxu0 %v1301
    %v1545 = vpop.f32.mrf.mxu0
    %1546 = vdwg.mxu0
    %v1547 = vmul.f32 %v1321, %v933
    %v1548 = vmul.f32 %v1382, %v959
    %v1549 = vmul.f32 %v1443, %v985
    %v1550 = vmul.f32 %v1504, %v1011
    %v1551 = vmul.f32 %v1324, %v1037
    %v1552 = vmul.f32 %v1385, %v1063
    %v1553 = vmul.f32 %v1446, %v1089
    %v1554 = vmul.f32 %v1507, %v1115
    %v1555 = vadd.f32 %v1547, %v1551
    %v1556 = vadd.f32 %v1548, %v1552
    %v1557 = vadd.f32 %v1549, %v1553
    %v1558 = vadd.f32 %v1550, %v1554
    %v1559 = vmul.f32 %v1327, %v1141
    %v1560 = vmul.f32 %v1388, %v1167
    %v1561 = vmul.f32 %v1449, %v1193
    %v1562 = vmul.f32 %v1510, %v1219
    %v1563 = vadd.f32 %v1555, %v1559
    %v1564 = vadd.f32 %v1556, %v1560
    %v1565 = vadd.f32 %v1557, %v1561
    %v1566 = vadd.f32 %v1558, %v1562
    %v1567 = vadd.f32 %v1563, %v1330
    %v1568 = vadd.f32 %v1564, %v1391
    %v1569 = vadd.f32 %v1565, %v1452
    %v1570 = vadd.f32 %v1566, %v1513
    %v1571 = vmul.f32 %v1333, %v933
    %v1572 = vmul.f32 %v1394, %v959
    %v1573 = vmul.f32 %v1455, %v985
    %v1574 = vmul.f32 %v1516, %v1011
    %v1575 = vmul.f32 %v1336, %v1037
    %v1576 = vmul.f32 %v1397, %v1063
    %v1577 = vmul.f32 %v1458, %v1089
    %v1578 = vmul.f32 %v1519, %v1115
    %v1579 = vadd.f32 %v1571, %v1575
    %v1580 = vadd.f32 %v1572, %v1576
    %v1581 = vadd.f32 %v1573, %v1577
    %v1582 = vadd.f32 %v1574, %v1578
    %v1583 = vmul.f32 %v1339, %v1141
    %v1584 = vmul.f32 %v1400, %v1167
    %v1585 = vmul.f32 %v1461, %v1193
    %v1586 = vmul.f32 %v1522, %v1219
    %v1587 = vadd.f32 %v1579, %v1583
    %v1588 = vadd.f32 %v1580, %v1584
    %v1589 = vadd.f32 %v1581, %v1585
    %v1590 = vadd.f32 %v1582, %v1586
    %v1591 = vadd.f32 %v1587, %v1342
    %v1592 = vadd.f32 %v1588, %v1403
    %v1593 = vadd.f32 %v1589, %v1464
    %v1594 = vadd.f32 %v1590, %v1525
    %v1595 = vmul.f32 %v1345, %v933
    %v1596 = vmul.f32 %v1406, %v959
    %v1597 = vmul.f32 %v1467, %v985
    %v1598 = vmul.f32 %v1528, %v1011
    %v1599 = vmul.f32 %v1348, %v1037
    %v1600 = vmul.f32 %v1409, %v1063
    %v1601 = vmul.f32 %v1470, %v1089
    %v1602 = vmul.f32 %v1531, %v1115
    %v1603 = vadd.f32 %v1595, %v1599
    %v1604 = vadd.f32 %v1596, %v1600
    %v1605 = vadd.f32 %v1597, %v1601
    %v1606 = vadd.f32 %v1598, %v1602
    %v1607 = vmul.f32 %v1351, %v1141
    %v1608 = vmul.f32 %v1412, %v1167
    %v1609 = vmul.f32 %v1473, %v1193
    %v1610 = vmul.f32 %v1534, %v1219
    %v1611 = vadd.f32 %v1603, %v1607
    %v1612 = vadd.f32 %v1604, %v1608
    %v1613 = vadd.f32 %v1605, %v1609
    %v1614 = vadd.f32 %v1606, %v1610
    %v1615 = vadd.f32 %v1611, %v1354
    %v1616 = vadd.f32 %v1612, %v1415
    %v1617 = vadd.f32 %v1613, %v1476
    %v1618 = vadd.f32 %v1614, %v1537
    %1619 = vst [vmem:[#allocation5] sm:$0xff] %v1567
    %1620 = vst [vmem:[#allocation5 + $0x8] sm:$0xff] %v1568
    %1621 = vst [vmem:[#allocation5 + $0x10] sm:$0xff] %v1569
    %1622 = vst [vmem:[#allocation5 + $0x18] sm:$0xff] %v1570
    %s1623 = scalar_lea.vmem [#allocation5], 32
    %1624 = vst [vmem:[%s1623] sm:$0xff] %v1591
    %1625 = vst [vmem:[%s1623 + $0x8] sm:$0xff] %v1592
    %1626 = vst [vmem:[%s1623 + $0x10] sm:$0xff] %v1593
    %1627 = vst [vmem:[%s1623 + $0x18] sm:$0xff] %v1594
    %s1628 = scalar_lea.vmem [#allocation5], 64
    %1629 = vst [vmem:[%s1628] sm:$0xff] %v1615
    %1630 = vst [vmem:[%s1628 + $0x8] sm:$0xff] %v1616
    %1631 = vst [vmem:[%s1628 + $0x10] sm:$0xff] %v1617
    %1632 = vst [vmem:[%s1628 + $0x18] sm:$0xff] %v1618
    // Predicated region
    $region22: #{tpu_custom_call.1} parent=1 // pred_check
      _
    $region23: #{tpu_custom_call.1} parent=1 // pred_check_branch
      %1634 = sbr.rel (0) target = $region25
    $region24: #{tpu_custom_call.1} parent=1 // pred_region
      %1636 = vsyncadd [#allocation4], 0
      %s1637 = sshll.u32 [#allocation5], 4
      %s1638 = int_to_ptr.vmem [resolvable:$true] %s1637
      %s1639 = sshll.u32 %s4, 4
      %s1640 = int_to_ptr.hbm [resolvable:$true] %s1639
      %1645 = dma.vmem_to_hbm [thread:$0]  %s1638, 1536, %s1640, [#allocation4], 512, 512, 32
    $region25: #{tpu_custom_call.1} parent=1 // pred_fallthru
      _
    // Predicated region
    $region26: #{tpu_custom_call.1} parent=1 // pred_check
      _
    $region27: #{tpu_custom_call.1} parent=1 // pred_check_branch
      %1647 = sbr.rel (0) target = $region29
    $region28: #{tpu_custom_call.1} parent=1 // pred_region
      %1649 = dma.done [#allocation4], 1536
    $region29: #{tpu_custom_call.1} parent=1 // pred_fallthru
      _
    %1650 = vsyncpa [#allocation3], 1
    %1651 = vsyncpa [#allocation4], 1

</llo_original>
